<compile_context>
chip_gen: v7x
topology: tpu7x:2x2x1
jax: 0.10.0
libtpu: 0.0.40
codegen_flags: <defaults>
</compile_context>

<pallas_src>
import jax
import jax.numpy as jnp
from jax.experimental import pallas as pl
from jax.experimental.pallas import tpu as pltpu


H_PAD = 128            # hidden width padded to one full vreg lane width
A_PAD = 128            # lane-dense padded action width
MAX_BATCH_TILE = 2048  # rows per grid step (upper bound)
MIN_BATCH_TILE = 128
NEG_INF = -1e30        # bias on padded action lanes -> exp underflows to 0


def _round_up(x, m):
    return ((x + m - 1) // m) * m


def _choose_tiling(batch, max_tile=MAX_BATCH_TILE, quantum=MIN_BATCH_TILE):
    """Pick (batch_tile, n_tiles): few large tiles, >=2 (even) steps when possible
    so v7x's two TensorCores both get work via the 'parallel' batch axis."""
    n = max(2, pl.cdiv(batch, max_tile))
    if n % 2:
        n += 1
    tile = _round_up(max(quantum, pl.cdiv(batch, n)), quantum)
    tile = min(tile, max_tile)
    n = pl.cdiv(batch, tile)
    return tile, n


def behavior_net_kernel(x_ref, w_in_ref, w_trunk_ref, w_out_ref, bias_ref, out_ref):
    f32 = jnp.float32
    bf16 = jnp.bfloat16

    two_h = w_in_ref.shape[1]          # 2 * padded hidden width
    hp = two_h // 2                    # padded hidden width (== 128)
    a_pad = w_out_ref.shape[1]         # padded action width (== 128)

    b = bias_ref[...]                  # (8, LANE) f32 bias slab, loaded once

    # --- fused entry branches: one block-diagonal matmul ---
    z = jnp.dot(x_ref[...], w_in_ref[...], preferred_element_type=f32)
    g = jax.nn.sigmoid(z + b[0:1, :two_h])       # f32 on VPU/EUP
    h = g[:, :hp] * g[:, hp:two_h]               # whole-vreg gate split (hp = 128)

    # --- MLP trunk: 3 x (Linear + ReLU), weights stacked in one slab ---
    for k in range(3):
        h = jnp.dot(h.astype(bf16), w_trunk_ref[k], preferred_element_type=f32)
        h = jnp.maximum(h + b[k + 1:k + 2, :hp], 0.0)

    # --- head + softmax; padded lanes carry -1e30 bias so exp() == 0 exactly ---
    logits = jnp.dot(h.astype(bf16), w_out_ref[...], preferred_element_type=f32)
    logits = logits + b[4:5, :a_pad]
    m = jnp.max(logits, axis=-1, keepdims=True)
    e = jnp.exp(logits - m)
    s = jnp.sum(e, axis=-1, keepdims=True)
    inv = pl.reciprocal(s, approx=True)
    inv = inv * (2.0 - s * inv)        # one Newton step -> near-exact normalization
    out_ref[...] = (e * inv).astype(out_ref.dtype)   # lane-dense bf16 store


def behavior_net_forward(state, command, params, *, batch_tile=None, unpad=True):
    """state (B, S), command (B, C) -> action probabilities.

    Default: (B, action_size) bf16 probabilities.  unpad=False returns the raw
    lane-dense (B_pad, 128) slab (padded lanes are exactly 0) so consumers can
    avoid the wrapper slice copy (most valuable on v5e).
    """
    w_in, w_trunk, w_out, bias = (params["w_in"], params["w_trunk"],
                                  params["w_out"], params["bias"])
    action_size = params["action_size"]
    a_pad = w_out.shape[1]
    two_h = w_in.shape[1]
    hp = w_trunk.shape[-1]

    x = jnp.concatenate([state, command], axis=-1).astype(jnp.bfloat16)
    B, in_dim = x.shape

    if batch_tile is None:
        batch_tile, n_tiles = _choose_tiling(B)
    else:
        n_tiles = pl.cdiv(B, batch_tile)
    B_pad = n_tiles * batch_tile
    if B_pad != B:
        x = jnp.pad(x, ((0, B_pad - B), (0, 0)))

    out_dtype = jnp.bfloat16           # halves output writeback vs f32

    def nbytes(a):
        return a.size * jnp.dtype(a.dtype).itemsize

    cost = pl.CostEstimate(
        flops=2 * B_pad * (in_dim * two_h + 3 * hp * hp + hp * a_pad),
        transcendentals=B_pad * (two_h + a_pad + 1),
        bytes_accessed=(nbytes(x) + B_pad * a_pad * 2
                        + nbytes(w_in) + nbytes(w_trunk) + nbytes(w_out)
                        + nbytes(bias)),
    )

    out = pl.pallas_call(
        behavior_net_kernel,
        out_shape=jax.ShapeDtypeStruct((B_pad, a_pad), out_dtype),
        grid=(n_tiles,),
        in_specs=[
            pl.BlockSpec((batch_tile, in_dim), lambda i: (i, 0)),   # x: per-tile
            pl.BlockSpec(w_in.shape, lambda i: (0, 0)),             # VMEM-resident
            pl.BlockSpec(w_trunk.shape, lambda i: (0, 0, 0)),       # VMEM-resident
            pl.BlockSpec(w_out.shape, lambda i: (0, 0)),            # VMEM-resident
            pl.BlockSpec(bias.shape, lambda i: (0, 0)),             # VMEM-resident
        ],
        out_specs=pl.BlockSpec((batch_tile, a_pad), lambda i: (i, 0)),
        compiler_params=pltpu.CompilerParams(
            dimension_semantics=("parallel",)                       # 2 TCs on v7x
        ),
        cost_estimate=cost,
    )(x, w_in, w_trunk, w_out, bias)

    if not unpad:
        return out
    return out[:B, :action_size]


def init_packed_params(key, state_size, action_size, command_size, hidden_size=64):
    """nn.Linear-style init (uniform +/- 1/sqrt(fan_in)), packed into 4 slabs.

    Weights are (in_features, out_features) so the kernel does x @ W + b and are
    zero-padded to 128-lane boundaries; slabs are bf16 (MXU-native), bias f32.
    Also returns the raw f32 per-layer weights for a faithful reference.
    """
    def linear(k, fan_in, fan_out):
        kw, kb = jax.random.split(k)
        bound = 1.0 / float(fan_in) ** 0.5
        w = jax.random.uniform(kw, (fan_in, fan_out), jnp.float32, -bound, bound)
        b = jax.random.uniform(kb, (fan_out,), jnp.float32, -bound, bound)
        return w, b

    S, C, A, H = state_size, command_size, action_size, hidden_size
    Hp = _round_up(max(H, H_PAD), 128)
    Ap = _round_up(max(A, A_PAD), 128)

    keys = jax.random.split(key, 6)
    ws, bs = linear(keys[0], S, H)
    wc, bc = linear(keys[1], C, H)
    w1, b1 = linear(keys[2], H, H)
    w2, b2 = linear(keys[3], H, H)
    w3, b3 = linear(keys[4], H, H)
    w4, b4 = linear(keys[5], H, A)

    # fused entry weight: block-diagonal [[Ws, 0], [0, Wc]], padded to (S+C, 2*Hp)
    w_in = jnp.zeros((S + C, 2 * Hp), jnp.float32)
    w_in = w_in.at[:S, :H].set(ws).at[S:, Hp:Hp + H].set(wc)

    # stacked trunk weights padded to (3, Hp, Hp); the all-zero pad ROWS kill the
    # sigmoid(0)*sigmoid(0)=0.25 values sitting in the padded gate lanes.
    w_trunk = jnp.zeros((3, Hp, Hp), jnp.float32)
    w_trunk = w_trunk.at[0, :H, :H].set(w1).at[1, :H, :H].set(w2).at[2, :H, :H].set(w3)

    # head weight padded to lane-dense (Hp, Ap)
    w_out = jnp.zeros((Hp, Ap), jnp.float32).at[:H, :A].set(w4)

    # single f32 bias slab: row0 = [bs|0|bc|0], rows1-3 trunk (zero pad),
    # row4 = head bias with -1e30 on the padded action lanes.
    lane = max(2 * Hp, Ap)
    bias = jnp.zeros((8, lane), jnp.float32)
    bias = bias.at[0, :H].set(bs).at[0, Hp:Hp + H].set(bc)
    bias = bias.at[1, :H].set(b1).at[2, :H].set(b2).at[3, :H].set(b3)
    bias = bias.at[4, :Ap].set(NEG_INF)
    bias = bias.at[4, :A].set(b4)

    packed = dict(
        w_in=w_in.astype(jnp.bfloat16),
        w_trunk=w_trunk.astype(jnp.bfloat16),
        w_out=w_out.astype(jnp.bfloat16),
        bias=bias,
        action_size=A,
    )
    raw = dict(ws=ws, bs=bs, wc=wc, bc=bc, w1=w1, b1=b1, w2=w2, b2=b2,
               w3=w3, b3=b3, w4=w4, b4=b4)
    return packed, raw


def behavior_net_reference(state, command, raw):
    """Faithful f32 reference of the PyTorch module (validates packing+padding)."""
    f32 = jnp.float32
    s = jax.nn.sigmoid(state.astype(f32) @ raw["ws"] + raw["bs"])
    c = jax.nn.sigmoid(command.astype(f32) @ raw["wc"] + raw["bc"])
    h = s * c
    h = jnp.maximum(h @ raw["w1"] + raw["b1"], 0.0)
    h = jnp.maximum(h @ raw["w2"] + raw["b2"], 0.0)
    h = jnp.maximum(h @ raw["w3"] + raw["b3"], 0.0)
    logits = h @ raw["w4"] + raw["b4"]
    return jax.nn.softmax(logits, axis=-1)


if __name__ == "__main__":
    # small, module-consistent shapes (hidden_size = module default 64);
    # batch=256 -> two 128-row grid tiles (exercises the parallel batch grid).
    batch = 256
    state_size = 6
    command_size = 2
    action_size = 4
    hidden_size = 64

    key = jax.random.PRNGKey(0)
    k_params, k_state, k_cmd = jax.random.split(key, 3)

    params, raw = init_packed_params(k_params, state_size, action_size,
                                     command_size, hidden_size)
    state = jax.random.normal(k_state, (batch, state_size), jnp.float32)
    command = jax.random.normal(k_cmd, (batch, command_size), jnp.float32)

    probs = behavior_net_forward(state, command, params)
    probs = jax.block_until_ready(probs)

    assert probs.shape == (batch, action_size)
    probs_f32 = probs.astype(jnp.float32)
    assert bool(jnp.all(jnp.isfinite(probs_f32)))
    # Newton-refined reciprocal -> near-exact normalization; residual error is
    # only the bf16 output rounding.
    assert bool(jnp.allclose(jnp.sum(probs_f32, axis=-1), 1.0, atol=1e-2))

    # faithful fp32 reference built from the raw (unpacked) weights; mismatch is
    # bf16 weight quantization + bf16 output rounding only.
    ref = behavior_net_reference(state, command, raw)
    assert bool(jnp.allclose(probs_f32, ref, atol=5e-2))

    print("KERNEL_OK")
</pallas_src>

<mosaic_0001>
module attributes {stable_mosaic.version = 11 : i64} {
  func.func @behavior_net_kernel(%arg0: i32, %arg1: memref<128x8xbf16, #tpu.memory_space<vmem>>, %arg2: memref<8x256xbf16, #tpu.memory_space<vmem>>, %arg3: memref<3x128x128xbf16, #tpu.memory_space<vmem>>, %arg4: memref<128x128xbf16, #tpu.memory_space<vmem>>, %arg5: memref<8x256xf32, #tpu.memory_space<vmem>>, %arg6: memref<128x128xbf16, #tpu.memory_space<vmem>>) attributes {dimension_semantics = [#tpu.dimension_semantics<parallel>], iteration_bounds = array<i64: 2>, scalar_prefetch = 0 : i64, scratch_operands = 0 : i64, tpu.core_type = #tpu.core_type<tc>, window_params = [{transform_indices = @transform_0, window_bounds = array<i64: 128, 8>}, {pipeline_mode = #tpu.pipeline_mode<synchronous>, transform_indices = @transform_1, window_bounds = array<i64: 8, 256>}, {pipeline_mode = #tpu.pipeline_mode<synchronous>, transform_indices = @transform_2, window_bounds = array<i64: 3, 128, 128>}, {pipeline_mode = #tpu.pipeline_mode<synchronous>, transform_indices = @transform_3, window_bounds = array<i64: 128, 128>}, {pipeline_mode = #tpu.pipeline_mode<synchronous>, transform_indices = @transform_4, window_bounds = array<i64: 8, 256>}, {transform_indices = @transform_5, window_bounds = array<i64: 128, 128>}]} {
    %c0 = arith.constant 0 : index
    %c0_0 = arith.constant 0 : index
    %0 = vector.load %arg5[%c0, %c0_0] : memref<8x256xf32, #tpu.memory_space<vmem>>, vector<8x256xf32>
    %c0_1 = arith.constant 0 : index
    %c0_2 = arith.constant 0 : index
    %1 = vector.load %arg1[%c0_1, %c0_2] : memref<128x8xbf16, #tpu.memory_space<vmem>>, vector<128x8xbf16>
    %c0_3 = arith.constant 0 : index
    %c0_4 = arith.constant 0 : index
    %2 = vector.load %arg2[%c0_3, %c0_4] : memref<8x256xbf16, #tpu.memory_space<vmem>>, vector<8x256xbf16>
    %cst = arith.constant dense<0.000000e+00> : vector<128x256xf32>
    %3 = tpu.matmul %1, %2, %cst {dimension_numbers = #tpu.dot_dimension_numbers<[1], [0], [0], [1], [0, 0, 1, 1], [], []>} : vector<128x8xbf16>, vector<8x256xbf16>, vector<128x256xf32> -> vector<128x256xf32>
    %4 = vector.extract_strided_slice %0 {offsets = [0, 0], sizes = [1, 256], strides = [1, 1]} : vector<8x256xf32> to vector<1x256xf32>
    %5 = vector.broadcast %4 : vector<1x256xf32> to vector<128x256xf32>
    %6 = arith.addf %3, %5 : vector<128x256xf32>
    %7 = arith.negf %6 : vector<128x256xf32>
    %8 = math.exp %7 : vector<128x256xf32>
    %cst_5 = arith.constant 1.000000e+00 : f32
    %9 = vector.broadcast %cst_5 : f32 to vector<128x256xf32>
    %10 = arith.addf %9, %8 : vector<128x256xf32>
    %11 = arith.divf %9, %10 : vector<128x256xf32>
    %12 = vector.extract_strided_slice %11 {offsets = [0, 0], sizes = [128, 128], strides = [1, 1]} : vector<128x256xf32> to vector<128x128xf32>
    %13 = vector.extract_strided_slice %11 {offsets = [0, 128], sizes = [128, 128], strides = [1, 1]} : vector<128x256xf32> to vector<128x128xf32>
    %14 = arith.mulf %12, %13 : vector<128x128xf32>
    %15 = arith.truncf %14 : vector<128x128xf32> to vector<128x128xbf16>
    %c0_6 = arith.constant 0 : index
    %c0_7 = arith.constant 0 : index
    %c0_8 = arith.constant 0 : index
    %16 = vector.load %arg3[%c0_6, %c0_7, %c0_8] : memref<3x128x128xbf16, #tpu.memory_space<vmem>>, vector<1x128x128xbf16>
    %17 = vector.shape_cast %16 : vector<1x128x128xbf16> to vector<128x128xbf16>
    %cst_9 = arith.constant dense<0.000000e+00> : vector<128x128xf32>
    %18 = tpu.matmul %15, %17, %cst_9 {dimension_numbers = #tpu.dot_dimension_numbers<[1], [0], [0], [1], [0, 0, 1, 1], [], []>} : vector<128x128xbf16>, vector<128x128xbf16>, vector<128x128xf32> -> vector<128x128xf32>
    %19 = vector.extract_strided_slice %0 {offsets = [1, 0], sizes = [1, 128], strides = [1, 1]} : vector<8x256xf32> to vector<1x128xf32>
    %20 = vector.broadcast %19 : vector<1x128xf32> to vector<128x128xf32>
    %21 = arith.addf %18, %20 : vector<128x128xf32>
    %cst_10 = arith.constant 0.000000e+00 : f32
    %22 = vector.broadcast %cst_10 : f32 to vector<128x128xf32>
    %23 = arith.maximumf %21, %22 : vector<128x128xf32>
    %24 = arith.truncf %23 : vector<128x128xf32> to vector<128x128xbf16>
    %c1 = arith.constant 1 : index
    %c0_11 = arith.constant 0 : index
    %c0_12 = arith.constant 0 : index
    %25 = vector.load %arg3[%c1, %c0_11, %c0_12] : memref<3x128x128xbf16, #tpu.memory_space<vmem>>, vector<1x128x128xbf16>
    %26 = vector.shape_cast %25 : vector<1x128x128xbf16> to vector<128x128xbf16>
    %cst_13 = arith.constant dense<0.000000e+00> : vector<128x128xf32>
    %27 = tpu.matmul %24, %26, %cst_13 {dimension_numbers = #tpu.dot_dimension_numbers<[1], [0], [0], [1], [0, 0, 1, 1], [], []>} : vector<128x128xbf16>, vector<128x128xbf16>, vector<128x128xf32> -> vector<128x128xf32>
    %28 = vector.extract_strided_slice %0 {offsets = [2, 0], sizes = [1, 128], strides = [1, 1]} : vector<8x256xf32> to vector<1x128xf32>
    %29 = vector.broadcast %28 : vector<1x128xf32> to vector<128x128xf32>
    %30 = arith.addf %27, %29 : vector<128x128xf32>
    %cst_14 = arith.constant 0.000000e+00 : f32
    %31 = vector.broadcast %cst_14 : f32 to vector<128x128xf32>
    %32 = arith.maximumf %30, %31 : vector<128x128xf32>
    %33 = arith.truncf %32 : vector<128x128xf32> to vector<128x128xbf16>
    %c2 = arith.constant 2 : index
    %c0_15 = arith.constant 0 : index
    %c0_16 = arith.constant 0 : index
    %34 = vector.load %arg3[%c2, %c0_15, %c0_16] : memref<3x128x128xbf16, #tpu.memory_space<vmem>>, vector<1x128x128xbf16>
    %35 = vector.shape_cast %34 : vector<1x128x128xbf16> to vector<128x128xbf16>
    %cst_17 = arith.constant dense<0.000000e+00> : vector<128x128xf32>
    %36 = tpu.matmul %33, %35, %cst_17 {dimension_numbers = #tpu.dot_dimension_numbers<[1], [0], [0], [1], [0, 0, 1, 1], [], []>} : vector<128x128xbf16>, vector<128x128xbf16>, vector<128x128xf32> -> vector<128x128xf32>
    %37 = vector.extract_strided_slice %0 {offsets = [3, 0], sizes = [1, 128], strides = [1, 1]} : vector<8x256xf32> to vector<1x128xf32>
    %38 = vector.broadcast %37 : vector<1x128xf32> to vector<128x128xf32>
    %39 = arith.addf %36, %38 : vector<128x128xf32>
    %cst_18 = arith.constant 0.000000e+00 : f32
    %40 = vector.broadcast %cst_18 : f32 to vector<128x128xf32>
    %41 = arith.maximumf %39, %40 : vector<128x128xf32>
    %42 = arith.truncf %41 : vector<128x128xf32> to vector<128x128xbf16>
    %c0_19 = arith.constant 0 : index
    %c0_20 = arith.constant 0 : index
    %43 = vector.load %arg4[%c0_19, %c0_20] : memref<128x128xbf16, #tpu.memory_space<vmem>>, vector<128x128xbf16>
    %cst_21 = arith.constant dense<0.000000e+00> : vector<128x128xf32>
    %44 = tpu.matmul %42, %43, %cst_21 {dimension_numbers = #tpu.dot_dimension_numbers<[1], [0], [0], [1], [0, 0, 1, 1], [], []>} : vector<128x128xbf16>, vector<128x128xbf16>, vector<128x128xf32> -> vector<128x128xf32>
    %45 = vector.extract_strided_slice %0 {offsets = [4, 0], sizes = [1, 128], strides = [1, 1]} : vector<8x256xf32> to vector<1x128xf32>
    %46 = vector.broadcast %45 : vector<1x128xf32> to vector<128x128xf32>
    %47 = arith.addf %44, %46 : vector<128x128xf32>
    %cst_22 = arith.constant dense<0xFF800000> : vector<128xf32>
    %48 = vector.multi_reduction <maximumf>, %47, %cst_22 [1] : vector<128x128xf32> to vector<128xf32>
    %49 = vector.shape_cast %48 : vector<128xf32> to vector<128x1xf32>
    %50 = vector.broadcast %49 : vector<128x1xf32> to vector<128x128xf32>
    %51 = arith.subf %47, %50 : vector<128x128xf32>
    %52 = math.exp %51 : vector<128x128xf32>
    %cst_23 = arith.constant dense<0.000000e+00> : vector<128xf32>
    %53 = vector.multi_reduction <add>, %52, %cst_23 [1] : vector<128x128xf32> to vector<128xf32>
    %54 = vector.shape_cast %53 : vector<128xf32> to vector<128x1xf32>
    %55 = tpu.reciprocal %54 {approx = true} : vector<128x1xf32> -> vector<128x1xf32>
    %56 = arith.mulf %54, %55 : vector<128x1xf32>
    %cst_24 = arith.constant 2.000000e+00 : f32
    %57 = vector.broadcast %cst_24 : f32 to vector<128x1xf32>
    %58 = arith.subf %57, %56 : vector<128x1xf32>
    %59 = arith.mulf %55, %58 : vector<128x1xf32>
    %60 = vector.broadcast %59 : vector<128x1xf32> to vector<128x128xf32>
    %61 = arith.mulf %52, %60 : vector<128x128xf32>
    %62 = arith.truncf %61 : vector<128x128xf32> to vector<128x128xbf16>
    %c0_25 = arith.constant 0 : index
    %c0_26 = arith.constant 0 : index
    %63 = vector.load %arg6[%c0_25, %c0_26] : memref<128x128xbf16, #tpu.memory_space<vmem>>, vector<128x128xbf16>
    tpu.vector_store %arg6[%c0_25, %c0_26], %62 {strides = array<i32>} : memref<128x128xbf16, #tpu.memory_space<vmem>>, vector<128x128xbf16>,
    return
  }
  func.func @transform_0(%arg0: i32) -> (i32, i32) {
    %c0_i32 = arith.constant 0 : i32
    %c0_i32_0 = arith.constant 0 : i32
    return %arg0, %c0_i32 : i32, i32
  }
  func.func @transform_1(%arg0: i32) -> (i32, i32) {
    %c0_i32 = arith.constant 0 : i32
    %c0_i32_0 = arith.constant 0 : i32
    %c0_i32_1 = arith.constant 0 : i32
    return %c0_i32, %c0_i32_0 : i32, i32
  }
  func.func @transform_2(%arg0: i32) -> (i32, i32, i32) {
    %c0_i32 = arith.constant 0 : i32
    %c0_i32_0 = arith.constant 0 : i32
    %c0_i32_1 = arith.constant 0 : i32
    %c0_i32_2 = arith.constant 0 : i32
    return %c0_i32, %c0_i32_0, %c0_i32_1 : i32, i32, i32
  }
  func.func @transform_3(%arg0: i32) -> (i32, i32) {
    %c0_i32 = arith.constant 0 : i32
    %c0_i32_0 = arith.constant 0 : i32
    %c0_i32_1 = arith.constant 0 : i32
    return %c0_i32, %c0_i32_0 : i32, i32
  }
  func.func @transform_4(%arg0: i32) -> (i32, i32) {
    %c0_i32 = arith.constant 0 : i32
    %c0_i32_0 = arith.constant 0 : i32
    %c0_i32_1 = arith.constant 0 : i32
    return %c0_i32, %c0_i32_0 : i32, i32
  }
  func.func @transform_5(%arg0: i32) -> (i32, i32) {
    %c0_i32 = arith.constant 0 : i32
    %c0_i32_0 = arith.constant 0 : i32
    return %arg0, %c0_i32 : i32, i32
  }
}

</mosaic_0001>

<llo_original>
// kernel: tpu_custom_call.1
$region0: #{tpu_custom_call.1}
  #allocation0 [shape = 'u32[]', space=smem, size = 0x4, offset = 0x4, fixed_abs, tag = 'smem constant byte address 0x4 - core index']
  #allocation1 [shape = 'u32[144,128]{1,0:T(1,128)}', space=vmem, size = 0x12000, scoped, tag = 'internal scratch']
  %s0 = inlined_call_operand.vmem [shape: bf16[256,8], index: 0, kind: input, shape index: {}]
  %s1 = inlined_call_operand.vmem [shape: bf16[8,256], index: 1, kind: input, shape index: {}]
  %s2 = inlined_call_operand.hbm [shape: bf16[3,128,128], index: 2, kind: input, shape index: {}]
  %s3 = inlined_call_operand.vmem [shape: bf16[128,128], index: 3, kind: input, shape index: {}]
  %s4 = inlined_call_operand.vmem [shape: f32[8,256], index: 4, kind: input, shape index: {}]
  %s5 = inlined_call_operand.hbm [shape: bf16[256,128], index: 5, kind: output, shape index: {}]
  %s6 = sld [smem:[#allocation0]]
  $region57: #{tpu_custom_call.1} parent=0
    _
  %s8 = ssub.s32 1, %s6
  %s9 = scalar_select 0, %s8, %s6
  $region1: #{tpu_custom_call.1} parent=0
    #allocation2 [shape = 'u8[98304]{0}', space=vmem, size = 0x18000, scoped, tag = 'input window, operand 2, single buffered']
    #allocation3 [shape = 's32[2]{0}', space=sflag, size = 0x8, scoped, tag = 'scoped memory for tpu_custom_call.1']
    #allocation4 [shape = 's32[2]{0}', space=sflag, size = 0x8, scoped, tag = 'scoped memory for tpu_custom_call.1']
    #allocation5 [shape = 'u8[65536]{0}', space=vmem, size = 0x10000, scoped, tag = 'output window, operand 0']
    %10 = vsyncpa [#allocation3], 0
    %11 = vsyncpa [#allocation4], 0
    %s12 = scalar_lea.sflag [#allocation4], 1
    %13 = vsyncpa %s12, 0
    loop: start=0, step=1, limit=4
    $region2: #{tpu_custom_call.1} parent=1 // loop_pre_header
      _
    $region3: #{tpu_custom_call.1} parent=1 // loop_header
      %s15 = sphi 0, %s19
      %p16 = scmp.ge.s32.totalorder %s15, 4
      %s25 = sphi 0, %s27
      %s28 = sphi 0, %s25
      %s29 = sphi 0, %s28
      %s45 = sphi 0, %s29
      %s49 = sphi 0, %s49
      %s51 = sphi 0, %s49
      %s52 = sphi 0, %s51
      %s66 = sphi 0, %s52
      %s70 = sphi 0, %s70
      %s72 = sphi 0, %s70
      %s73 = sphi 0, %s72
      %s87 = sphi 0, %s73
      %s91 = sphi 0, %s91
      %s93 = sphi 0, %s91
      %s94 = sphi 0, %s93
      %s108 = sphi 0, %s94
      %s112 = sphi 0, %s112
      %s114 = sphi 0, %s112
      %s115 = sphi 0, %s114
      %s129 = sphi 0, %s115
      %s135 = sphi 0, %s137
      %s138 = sphi 0, %s135
      %s139 = sphi 0, %s138
      %s155 = sphi 0, %s139
    $region4: #{tpu_custom_call.1} parent=1 // loop_header_branch
      %18 = sbr.rel (%p16) target = $region8
    $region5: #{tpu_custom_call.1} parent=1 // loop_body
      %s20 = ssub.s32 %s15, 1
      %s21 = ssub.s32 %s15, 2
      %s22 = sadd.s32 %s15, 1
      %s23 = ssub.s32 %s15, %s22
      %p24 = scmp.eq.s32.totalorder %s23, 0
      %s26 = sadd.s32 %s25, 1
      %s27 = scalar_select %p24, %s25, %s26
      %p30 = pneg %p24
      %p31 = scmp.eq.s32.totalorder %s15, 1
      %p32 = por %p30, %p31
      %p33 = scmp.ne.s32.totalorder %s25, %s28
      %p34 = scmp.eq.s32.totalorder %s15, 0
      %p35 = por %p33, %p34
      %p36 = scmp.ne.s32.totalorder %s25, %s28
      %p37 = scmp.eq.s32.totalorder %s20, 1
      %p38 = por %p36, %p37
      %p39 = scmp.ne.s32.totalorder %s28, %s29
      %p40 = scmp.eq.s32.totalorder %s20, 0
      %p41 = por %p39, %p40
      %p42 = scmp.ne.s32.totalorder %s28, %s29
      %p43 = scmp.eq.s32.totalorder %s21, 1
      %p44 = por %p42, %p43
      %p46 = scmp.ne.s32.totalorder %s29, %s45
      %p47 = scmp.eq.s32.totalorder %s21, 0
      %p48 = por %p46, %p47
      %s50 = sadd.s32 %s49, 1
      %p53 = scmp.eq.s32.totalorder %s15, 1
      %p54 = scmp.ne.s32.totalorder %s49, %s51
      %p55 = scmp.eq.s32.totalorder %s15, 0
      %p56 = por %p54, %p55
      %p57 = scmp.ne.s32.totalorder %s49, %s51
      %p58 = scmp.eq.s32.totalorder %s20, 1
      %p59 = por %p57, %p58
      %p60 = scmp.ne.s32.totalorder %s51, %s52
      %p61 = scmp.eq.s32.totalorder %s20, 0
      %p62 = por %p60, %p61
      %p63 = scmp.ne.s32.totalorder %s51, %s52
      %p64 = scmp.eq.s32.totalorder %s21, 1
      %p65 = por %p63, %p64
      %p67 = scmp.ne.s32.totalorder %s52, %s66
      %p68 = scmp.eq.s32.totalorder %s21, 0
      %p69 = por %p67, %p68
      %s71 = sadd.s32 %s70, 1
      %p74 = scmp.eq.s32.totalorder %s15, 1
      %p75 = scmp.ne.s32.totalorder %s70, %s72
      %p76 = scmp.eq.s32.totalorder %s15, 0
      %p77 = por %p75, %p76
      %p78 = scmp.ne.s32.totalorder %s70, %s72
      %p79 = scmp.eq.s32.totalorder %s20, 1
      %p80 = por %p78, %p79
      %p81 = scmp.ne.s32.totalorder %s72, %s73
      %p82 = scmp.eq.s32.totalorder %s20, 0
      %p83 = por %p81, %p82
      %p84 = scmp.ne.s32.totalorder %s72, %s73
      %p85 = scmp.eq.s32.totalorder %s21, 1
      %p86 = por %p84, %p85
      %p88 = scmp.ne.s32.totalorder %s73, %s87
      %p89 = scmp.eq.s32.totalorder %s21, 0
      %p90 = por %p88, %p89
      %s92 = sadd.s32 %s91, 1
      %p95 = scmp.eq.s32.totalorder %s15, 1
      %p96 = scmp.ne.s32.totalorder %s91, %s93
      %p97 = scmp.eq.s32.totalorder %s15, 0
      %p98 = por %p96, %p97
      %p99 = scmp.ne.s32.totalorder %s91, %s93
      %p100 = scmp.eq.s32.totalorder %s20, 1
      %p101 = por %p99, %p100
      %p102 = scmp.ne.s32.totalorder %s93, %s94
      %p103 = scmp.eq.s32.totalorder %s20, 0
      %p104 = por %p102, %p103
      %p105 = scmp.ne.s32.totalorder %s93, %s94
      %p106 = scmp.eq.s32.totalorder %s21, 1
      %p107 = por %p105, %p106
      %p109 = scmp.ne.s32.totalorder %s94, %s108
      %p110 = scmp.eq.s32.totalorder %s21, 0
      %p111 = por %p109, %p110
      %s113 = sadd.s32 %s112, 1
      %p116 = scmp.eq.s32.totalorder %s15, 1
      %p117 = scmp.ne.s32.totalorder %s112, %s114
      %p118 = scmp.eq.s32.totalorder %s15, 0
      %p119 = por %p117, %p118
      %p120 = scmp.ne.s32.totalorder %s112, %s114
      %p121 = scmp.eq.s32.totalorder %s20, 1
      %p122 = por %p120, %p121
      %p123 = scmp.ne.s32.totalorder %s114, %s115
      %p124 = scmp.eq.s32.totalorder %s20, 0
      %p125 = por %p123, %p124
      %p126 = scmp.ne.s32.totalorder %s114, %s115
      %p127 = scmp.eq.s32.totalorder %s21, 1
      %p128 = por %p126, %p127
      %p130 = scmp.ne.s32.totalorder %s115, %s129
      %p131 = scmp.eq.s32.totalorder %s21, 0
      %p132 = por %p130, %p131
      %s133 = ssub.s32 %s15, %s22
      %p134 = scmp.eq.s32.totalorder %s133, 0
      %s136 = sadd.s32 %s135, 1
      %s137 = scalar_select %p134, %s135, %s136
      %p140 = pneg %p134
      %p141 = scmp.eq.s32.totalorder %s15, 1
      %p142 = por %p140, %p141
      %p143 = scmp.ne.s32.totalorder %s135, %s138
      %p144 = scmp.eq.s32.totalorder %s15, 0
      %p145 = por %p143, %p144
      %p146 = scmp.ne.s32.totalorder %s135, %s138
      %p147 = scmp.eq.s32.totalorder %s20, 1
      %p148 = por %p146, %p147
      %p149 = scmp.ne.s32.totalorder %s138, %s139
      %p150 = scmp.eq.s32.totalorder %s20, 0
      %p151 = por %p149, %p150
      %p152 = scmp.ne.s32.totalorder %s138, %s139
      %p153 = scmp.eq.s32.totalorder %s21, 1
      %p154 = por %p152, %p153
      %p156 = scmp.ne.s32.totalorder %s139, %s155
      %p157 = scmp.eq.s32.totalorder %s21, 0
      %p158 = por %p156, %p157
      %p159 = scmp.le.s32.totalorder 1, %s15
      %p160 = scmp.lt.s32.totalorder %s15, 3
      %p161 = pnand %p159, %p160
      %p162 = pneg %p161
      // Predicated region
      $region9: #{tpu_custom_call.1} parent=5 // pred_check
        _
      $region10: #{tpu_custom_call.1} parent=5 // pred_check_branch
        %164 = sbr.rel (%p161) target = $region12
      $region11: #{tpu_custom_call.1} parent=5 // pred_region
        %s165 = ssub.s32 %s15, 1
        // Predicated region
        $region13: #{tpu_custom_call.1} parent=11 // pred_check
          %p166 = pneg %p62
        $region14: #{tpu_custom_call.1} parent=11 // pred_check_branch
          %168 = sbr.rel (%p166) target = $region16
        $region15: #{tpu_custom_call.1} parent=11 // pred_region
          _
        $region16: #{tpu_custom_call.1} parent=11 // pred_fallthru
          _
        // Predicated region
        $region17: #{tpu_custom_call.1} parent=11 // pred_check
          %p169 = pneg %p83
        $region18: #{tpu_custom_call.1} parent=11 // pred_check_branch
          %171 = sbr.rel (%p169) target = $region20
        $region19: #{tpu_custom_call.1} parent=11 // pred_region
          %s173 = ssub.s32 3072, 3072
          %174 = vsyncadd [#allocation3], %s173
          %s175 = sshll.u32 [#allocation2], 4
          %s176 = int_to_ptr.vmem [resolvable:$true] %s175
          %181 = dma.hbm_to_vmem [thread:$0]  %s2, 3072, %s176, [#allocation3], 64, 64, 4
        $region20: #{tpu_custom_call.1} parent=11 // pred_fallthru
          _
        // Predicated region
        $region21: #{tpu_custom_call.1} parent=11 // pred_check
          %p182 = pneg %p104
        $region22: #{tpu_custom_call.1} parent=11 // pred_check_branch
          %184 = sbr.rel (%p182) target = $region24
        $region23: #{tpu_custom_call.1} parent=11 // pred_region
          _
        $region24: #{tpu_custom_call.1} parent=11 // pred_fallthru
          _
        // Predicated region
        $region25: #{tpu_custom_call.1} parent=11 // pred_check
          %p185 = pneg %p125
        $region26: #{tpu_custom_call.1} parent=11 // pred_check_branch
          %187 = sbr.rel (%p185) target = $region28
        $region27: #{tpu_custom_call.1} parent=11 // pred_region
          _
        $region28: #{tpu_custom_call.1} parent=11 // pred_fallthru
          _
      $region12: #{tpu_custom_call.1} parent=5 // pred_fallthru
        _
      %p188 = scmp.lt.s32.totalorder %s15, 2
      // Predicated region
      $region29: #{tpu_custom_call.1} parent=5 // pred_check
        %p189 = pneg %p188
      $region30: #{tpu_custom_call.1} parent=5 // pred_check_branch
        %191 = sbr.rel (%p189) target = $region32
      $region31: #{tpu_custom_call.1} parent=5 // pred_region
        // Predicated region
        $region33: #{tpu_custom_call.1} parent=31 // pred_check
          %p192 = pneg %p35
        $region34: #{tpu_custom_call.1} parent=31 // pred_check_branch
          %194 = sbr.rel (%p192) target = $region36
        $region35: #{tpu_custom_call.1} parent=31 // pred_region
          %s195 = smul.u32 16, %s15
          %p196 = scmp.lt.s32.totalorder %s195, 31
          %s197 = scalar_select %p196, %s195, 31
          %s198 = smul.addr %s197, 4
          %s199 = scalar_lea.vmem %s0, %s198
          %s200 = smul.u32 16, %s15
        $region36: #{tpu_custom_call.1} parent=31 // pred_fallthru
          _
      $region32: #{tpu_custom_call.1} parent=5 // pred_fallthru
        _
      %p201 = scmp.le.s32.totalorder 1, %s15
      %p202 = scmp.lt.s32.totalorder %s15, 3
      %p203 = pnand %p201, %p202
      %p204 = pneg %p203
      // Predicated region
      $region37: #{tpu_custom_call.1} parent=5 // pred_check
        _
      $region38: #{tpu_custom_call.1} parent=5 // pred_check_branch
        %206 = sbr.rel (%p203) target = $region40
      $region39: #{tpu_custom_call.1} parent=5 // pred_region
        %s207 = ssub.s32 %s15, 1
        // Predicated region
        $region41: #{tpu_custom_call.1} parent=39 // pred_check
          %p208 = pneg %p83
        $region42: #{tpu_custom_call.1} parent=39 // pred_check_branch
          %210 = sbr.rel (%p208) target = $region44
        $region43: #{tpu_custom_call.1} parent=39 // pred_region
          %211 = dma.done [#allocation3], 3072
        $region44: #{tpu_custom_call.1} parent=39 // pred_fallthru
          _
        %s212 = smul.u32 16, %s20
        %p213 = scmp.lt.s32.totalorder %s212, 31
        %s214 = scalar_select %p213, %s212, 31
        %s215 = smul.addr %s214, 4
        %s216 = scalar_lea.vmem %s0, %s215
        %p217 = pneg %p41
        %p218 = pneg %p38
        %p219 = pneg %p62
        %p220 = pneg %p59
        %p221 = pneg %p83
        %p222 = pneg %p80
        %p223 = pneg %p104
        %p224 = pneg %p101
        %p225 = pneg %p125
        %p226 = pneg %p122
        %p227 = pneg %p151
        %p228 = pneg %p148
        %s229 = sand.u32 %s138, 1
        %s230 = scalar_lea.sflag [#allocation4], %s229
        %s231 = sand.u32 %s138, 1
        %s232 = smul.addr %s231, 64
        %s233 = scalar_lea.vmem [#allocation5], %s232
        %s234 = smul.u32 16, %s20
        %p235 = scmp.lt.s32.totalorder %s234, 31
        %s236 = scalar_select %p235, %s234, 31
        %s237 = smul.addr %s236, 4
        %s238 = scalar_lea.vmem %s0, %s237
        %s239 = smul.u32 16, %s20
        %s240 = smul.u32 16, %s20
        %v242 = vld [vmem:[%s4] sm:$0xff]
        %v243 = vld [vmem:[%s4 + $0x8] sm:$0xff]
        %v244 = vld [vmem:[%s238] sm:$0xf]
        %v245 = vld [vmem:[%s238 + $0x4] sm:$0xf]
        %v246 = vld [vmem:[%s238 + $0x8] sm:$0xf]
        %v247 = vld [vmem:[%s238 + $0xc] sm:$0xf]
        %v248 = vld [vmem:[%s238 + $0x10] sm:$0xf]
        %v249 = vld [vmem:[%s238 + $0x14] sm:$0xf]
        %v250 = vld [vmem:[%s238 + $0x18] sm:$0xf]
        %v251 = vld [vmem:[%s238 + $0x1c] sm:$0xf]
        %v252 = vld [vmem:[%s238 + $0x20] sm:$0xf]
        %v253 = vld [vmem:[%s238 + $0x24] sm:$0xf]
        %v254 = vld [vmem:[%s238 + $0x28] sm:$0xf]
        %v255 = vld [vmem:[%s238 + $0x2c] sm:$0xf]
        %v256 = vld [vmem:[%s238 + $0x30] sm:$0xf]
        %v257 = vld [vmem:[%s238 + $0x34] sm:$0xf]
        %v258 = vld [vmem:[%s238 + $0x38] sm:$0xf]
        %v259 = vld [vmem:[%s238 + $0x3c] sm:$0xf]
        %v260 = vld [vmem:[%s1] sm:$0xff]
        %v261 = vlaneseq
        %v262 = vshrl.u32 %v261, 7
        %v263 = vsub.s32 0, %v262
        %v264 = vrot.slane %v242, %v263
        %v265 = vlaneseq
        %v266 = vshrl.u32 %v265, 7
        %v267 = vsub.s32 0, %v266
        %v268 = vrot.slane %v243, %v267
        %v285 = vunpack.c.l.b16 %v244
        %v286 = vunpack.c.l.b16 %v245
        %v287 = vunpack.c.l.b16 %v246
        %v288 = vunpack.c.l.b16 %v247
        %v289 = vunpack.c.l.b16 %v248
        %v290 = vunpack.c.l.b16 %v249
        %v291 = vunpack.c.l.b16 %v250
        %v292 = vunpack.c.l.b16 %v251
        %v293 = vunpack.c.l.b16 %v252
        %v294 = vunpack.c.l.b16 %v253
        %v295 = vunpack.c.l.b16 %v254
        %v296 = vunpack.c.l.b16 %v255
        %v297 = vunpack.c.l.b16 %v256
        %v298 = vunpack.c.l.b16 %v257
        %v299 = vunpack.c.l.b16 %v258
        %v300 = vunpack.c.l.b16 %v259
        %v301 = vpack.c.b16 %v286, %v285
        %v302 = vpack.c.b16 %v288, %v287
        %v303 = vpack.c.b16 %v290, %v289
        %v304 = vpack.c.b16 %v292, %v291
        %v305 = vpack.c.b16 %v294, %v293
        %v306 = vpack.c.b16 %v296, %v295
        %v307 = vpack.c.b16 %v298, %v297
        %v308 = vpack.c.b16 %v300, %v299
        %v310 = vunpack.c.l.b16 %v260
        %v311 = vunpack.c.h.b16 %v260
        %v312 = vpack.c.b16 %v310, %v310
        %v313 = vpack.c.b16 %v311, %v311
        %vm314 = vcmask 64512
        %v316 = vsel %vm314, %v301, 0
        %v319 = vsel %vm314, %v302, 0
        %v322 = vsel %vm314, %v303, 0
        %v325 = vsel %vm314, %v304, 0
        %v328 = vsel %vm314, %v305, 0
        %v331 = vsel %vm314, %v306, 0
        %v334 = vsel %vm314, %v307, 0
        %v337 = vsel %vm314, %v308, 0
        %vm339 = vcmask 1043456
        %v341 = vsel %vm339, %v312, 0
        %v344 = vsel %vm339, %v313, 0
        %346 = vmatprep.subr.bf16.mxu0 %v344
        %347 = vmatpush1.bf16.msra.mxu0 %v341
        %348 = vmatprep.subr.bf16.mxu0 0
        %349 = vmatpush1.bf16.msra.mxu0 0
        %350 = vmatprep.subr.bf16.mxu0 0
        %351 = vmatpush1.bf16.msra.mxu0 0
        %352 = vmatprep.subr.bf16.mxu0 0
        %353 = vmatpush1.bf16.msra.mxu0 0
        %354 = vmatprep.subr.bf16.mxu0 0
        %355 = vmatpush1.bf16.msra.mxu0 0
        %356 = vmatprep.subr.bf16.mxu0 0
        %357 = vmatpush1.bf16.msra.mxu0 0
        %358 = vmatprep.subr.bf16.mxu0 0
        %359 = vmatpush1.bf16.msra.mxu0 0
        %360 = vmatprep.subr.bf16.mxu0 0
        %361 = vmatpush1.bf16.msra.mxu0 0
        %362 = vmatprep.subr.bf16.mxu0 0
        %363 = vmatpush1.bf16.msra.mxu0 0
        %364 = vmatprep.subr.bf16.mxu0 0
        %365 = vmatpush1.bf16.msra.mxu0 0
        %366 = vmatprep.subr.bf16.mxu0 0
        %367 = vmatpush1.bf16.msra.mxu0 0
        %368 = vmatprep.subr.bf16.mxu0 0
        %369 = vmatpush1.bf16.msra.mxu0 0
        %370 = vmatprep.subr.bf16.mxu0 0
        %371 = vmatpush1.bf16.msra.mxu0 0
        %372 = vmatprep.subr.bf16.mxu0 0
        %373 = vmatpush1.bf16.msra.mxu0 0
        %374 = vmatprep.subr.bf16.mxu0 0
        %375 = vmatpush1.bf16.msra.mxu0 0
        %376 = vmatprep.subr.bf16.mxu0 0
        %377 = vmatpush1.bf16.msra.mxu0 0
        %378 = vmatprep.mubr.bf16.mxu0 0
        %379 = vmatmul.mubr.bf16.gmra.mrb[0].mxu0 %v316
        %v380 = vpop.f32.mrb[0].mxu0
        %v381 = vadd.f32 %v264, %v380
        %v382 = vpop.f32.mrb[0].mxu0
        %v383 = vadd.f32 %v268, %v382
        %v384 = vpop.f32.mrb[0].mxu0
        %v385 = vadd.f32 %v264, %v384
        %v386 = vpop.f32.mrb[0].mxu0
        %v387 = vadd.f32 %v268, %v386
        %388 = vmatprep.mubr.bf16.mxu0 0
        %389 = vmatmul.mubr.bf16.gmra.mrb[0].mxu0 %v319
        %v390 = vpop.f32.mrb[0].mxu0
        %v391 = vadd.f32 %v264, %v390
        %v392 = vpop.f32.mrb[0].mxu0
        %v393 = vadd.f32 %v268, %v392
        %v394 = vpop.f32.mrb[0].mxu0
        %v395 = vadd.f32 %v264, %v394
        %v396 = vpop.f32.mrb[0].mxu0
        %v397 = vadd.f32 %v268, %v396
        %398 = vmatprep.mubr.bf16.mxu0 0
        %399 = vmatmul.mubr.bf16.gmra.mrb[0].mxu0 %v322
        %v400 = vpop.f32.mrb[0].mxu0
        %v401 = vadd.f32 %v264, %v400
        %v402 = vpop.f32.mrb[0].mxu0
        %v403 = vadd.f32 %v268, %v402
        %v404 = vpop.f32.mrb[0].mxu0
        %v405 = vadd.f32 %v264, %v404
        %v406 = vpop.f32.mrb[0].mxu0
        %v407 = vadd.f32 %v268, %v406
        %408 = vmatprep.mubr.bf16.mxu0 0
        %409 = vmatmul.mubr.bf16.gmra.mrb[0].mxu0 %v325
        %v410 = vpop.f32.mrb[0].mxu0
        %v411 = vadd.f32 %v264, %v410
        %v412 = vpop.f32.mrb[0].mxu0
        %v413 = vadd.f32 %v268, %v412
        %v414 = vpop.f32.mrb[0].mxu0
        %v415 = vadd.f32 %v264, %v414
        %v416 = vpop.f32.mrb[0].mxu0
        %v417 = vadd.f32 %v268, %v416
        %418 = vmatprep.mubr.bf16.mxu0 0
        %419 = vmatmul.mubr.bf16.gmra.mrb[0].mxu0 %v328
        %v420 = vpop.f32.mrb[0].mxu0
        %v421 = vadd.f32 %v264, %v420
        %v422 = vpop.f32.mrb[0].mxu0
        %v423 = vadd.f32 %v268, %v422
        %v424 = vpop.f32.mrb[0].mxu0
        %v425 = vadd.f32 %v264, %v424
        %v426 = vpop.f32.mrb[0].mxu0
        %v427 = vadd.f32 %v268, %v426
        %428 = vmatprep.mubr.bf16.mxu0 0
        %429 = vmatmul.mubr.bf16.gmra.mrb[0].mxu0 %v331
        %v430 = vpop.f32.mrb[0].mxu0
        %v431 = vadd.f32 %v264, %v430
        %v432 = vpop.f32.mrb[0].mxu0
        %v433 = vadd.f32 %v268, %v432
        %v434 = vpop.f32.mrb[0].mxu0
        %v435 = vadd.f32 %v264, %v434
        %v436 = vpop.f32.mrb[0].mxu0
        %v437 = vadd.f32 %v268, %v436
        %438 = vmatprep.mubr.bf16.mxu0 0
        %439 = vmatmul.mubr.bf16.gmra.mrb[0].mxu0 %v334
        %v440 = vpop.f32.mrb[0].mxu0
        %v441 = vadd.f32 %v264, %v440
        %v442 = vpop.f32.mrb[0].mxu0
        %v443 = vadd.f32 %v268, %v442
        %v444 = vpop.f32.mrb[0].mxu0
        %v445 = vadd.f32 %v264, %v444
        %v446 = vpop.f32.mrb[0].mxu0
        %v447 = vadd.f32 %v268, %v446
        %448 = vmatprep.mubr.bf16.mxu0 0
        %449 = vmatmul.mubr.bf16.gmra.mrb[0].mxu0 %v337
        %v450 = vpop.f32.mrb[0].mxu0
        %v451 = vadd.f32 %v264, %v450
        %v452 = vpop.f32.mrb[0].mxu0
        %v453 = vadd.f32 %v268, %v452
        %v454 = vpop.f32.mrb[0].mxu0
        %v455 = vadd.f32 %v264, %v454
        %v456 = vpop.f32.mrb[0].mxu0
        %v457 = vadd.f32 %v268, %v456
        %458 = vdwg.mxu0
        %v459 = vxor.u32 %v381, 2147483648
        %v460 = vxor.u32 %v383, 2147483648
        %v461 = vxor.u32 %v385, 2147483648
        %v462 = vxor.u32 %v387, 2147483648
        %v463 = vxor.u32 %v391, 2147483648
        %v464 = vxor.u32 %v393, 2147483648
        %v465 = vxor.u32 %v395, 2147483648
        %v466 = vxor.u32 %v397, 2147483648
        %v467 = vxor.u32 %v401, 2147483648
        %v468 = vxor.u32 %v403, 2147483648
        %v469 = vxor.u32 %v405, 2147483648
        %v470 = vxor.u32 %v407, 2147483648
        %v471 = vxor.u32 %v411, 2147483648
        %v472 = vxor.u32 %v413, 2147483648
        %v473 = vxor.u32 %v415, 2147483648
        %v474 = vxor.u32 %v417, 2147483648
        %v475 = vxor.u32 %v421, 2147483648
        %v476 = vxor.u32 %v423, 2147483648
        %v477 = vxor.u32 %v425, 2147483648
        %v478 = vxor.u32 %v427, 2147483648
        %v479 = vxor.u32 %v431, 2147483648
        %v480 = vxor.u32 %v433, 2147483648
        %v481 = vxor.u32 %v435, 2147483648
        %v482 = vxor.u32 %v437, 2147483648
        %v483 = vxor.u32 %v441, 2147483648
        %v484 = vxor.u32 %v443, 2147483648
        %v485 = vxor.u32 %v445, 2147483648
        %v486 = vxor.u32 %v447, 2147483648
        %v487 = vxor.u32 %v451, 2147483648
        %v488 = vxor.u32 %v453, 2147483648
        %v489 = vxor.u32 %v455, 2147483648
        %v490 = vxor.u32 %v457, 2147483648
        %v491 = vmul.f32 %v459, 1.442695
        %v492 = vpow.pop %v491
        %v493 = vmul.f32 %v460, 1.442695
        %v494 = vpow.pop %v493
        %v495 = vmul.f32 %v461, 1.442695
        %v496 = vpow.pop %v495
        %v497 = vmul.f32 %v462, 1.442695
        %v498 = vpow.pop %v497
        %v499 = vmul.f32 %v463, 1.442695
        %v500 = vpow.pop %v499
        %v501 = vmul.f32 %v464, 1.442695
        %v502 = vpow.pop %v501
        %v503 = vmul.f32 %v465, 1.442695
        %v504 = vpow.pop %v503
        %v505 = vmul.f32 %v466, 1.442695
        %v506 = vpow.pop %v505
        %v507 = vmul.f32 %v467, 1.442695
        %v508 = vpow.pop %v507
        %v509 = vmul.f32 %v468, 1.442695
        %v510 = vpow.pop %v509
        %v511 = vmul.f32 %v469, 1.442695
        %v512 = vpow.pop %v511
        %v513 = vmul.f32 %v470, 1.442695
        %v514 = vpow.pop %v513
        %v515 = vmul.f32 %v471, 1.442695
        %v516 = vpow.pop %v515
        %v517 = vmul.f32 %v472, 1.442695
        %v518 = vpow.pop %v517
        %v519 = vmul.f32 %v473, 1.442695
        %v520 = vpow.pop %v519
        %v521 = vmul.f32 %v474, 1.442695
        %v522 = vpow.pop %v521
        %v523 = vmul.f32 %v475, 1.442695
        %v524 = vpow.pop %v523
        %v525 = vmul.f32 %v476, 1.442695
        %v526 = vpow.pop %v525
        %v527 = vmul.f32 %v477, 1.442695
        %v528 = vpow.pop %v527
        %v529 = vmul.f32 %v478, 1.442695
        %v530 = vpow.pop %v529
        %v531 = vmul.f32 %v479, 1.442695
        %v532 = vpow.pop %v531
        %v533 = vmul.f32 %v480, 1.442695
        %v534 = vpow.pop %v533
        %v535 = vmul.f32 %v481, 1.442695
        %v536 = vpow.pop %v535
        %v537 = vmul.f32 %v482, 1.442695
        %v538 = vpow.pop %v537
        %v539 = vmul.f32 %v483, 1.442695
        %v540 = vpow.pop %v539
        %v541 = vmul.f32 %v484, 1.442695
        %v542 = vpow.pop %v541
        %v543 = vmul.f32 %v485, 1.442695
        %v544 = vpow.pop %v543
        %v545 = vmul.f32 %v486, 1.442695
        %v546 = vpow.pop %v545
        %v547 = vmul.f32 %v487, 1.442695
        %v548 = vpow.pop %v547
        %v549 = vmul.f32 %v488, 1.442695
        %v550 = vpow.pop %v549
        %v551 = vmul.f32 %v489, 1.442695
        %v552 = vpow.pop %v551
        %v553 = vmul.f32 %v490, 1.442695
        %v554 = vpow.pop %v553
        %v555 = vadd.f32 %v492, 1.0
        %v556 = vadd.f32 %v494, 1.0
        %v557 = vadd.f32 %v496, 1.0
        %v558 = vadd.f32 %v498, 1.0
        %v559 = vadd.f32 %v500, 1.0
        %v560 = vadd.f32 %v502, 1.0
        %v561 = vadd.f32 %v504, 1.0
        %v562 = vadd.f32 %v506, 1.0
        %v563 = vadd.f32 %v508, 1.0
        %v564 = vadd.f32 %v510, 1.0
        %v565 = vadd.f32 %v512, 1.0
        %v566 = vadd.f32 %v514, 1.0
        %v567 = vadd.f32 %v516, 1.0
        %v568 = vadd.f32 %v518, 1.0
        %v569 = vadd.f32 %v520, 1.0
        %v570 = vadd.f32 %v522, 1.0
        %v571 = vadd.f32 %v524, 1.0
        %v572 = vadd.f32 %v526, 1.0
        %v573 = vadd.f32 %v528, 1.0
        %v574 = vadd.f32 %v530, 1.0
        %v575 = vadd.f32 %v532, 1.0
        %v576 = vadd.f32 %v534, 1.0
        %v577 = vadd.f32 %v536, 1.0
        %v578 = vadd.f32 %v538, 1.0
        %v579 = vadd.f32 %v540, 1.0
        %v580 = vadd.f32 %v542, 1.0
        %v581 = vadd.f32 %v544, 1.0
        %v582 = vadd.f32 %v546, 1.0
        %v583 = vadd.f32 %v548, 1.0
        %v584 = vadd.f32 %v550, 1.0
        %v585 = vadd.f32 %v552, 1.0
        %v586 = vadd.f32 %v554, 1.0
        %v587 = vrcp.pop %v555
        %v588 = vmul.f32 1.0, %v587
        %v589 = vrcp.pop %v556
        %v590 = vmul.f32 1.0, %v589
        %v591 = vrcp.pop %v557
        %v592 = vmul.f32 1.0, %v591
        %v593 = vrcp.pop %v558
        %v594 = vmul.f32 1.0, %v593
        %v595 = vrcp.pop %v559
        %v596 = vmul.f32 1.0, %v595
        %v597 = vrcp.pop %v560
        %v598 = vmul.f32 1.0, %v597
        %v599 = vrcp.pop %v561
        %v600 = vmul.f32 1.0, %v599
        %v601 = vrcp.pop %v562
        %v602 = vmul.f32 1.0, %v601
        %v603 = vrcp.pop %v563
        %v604 = vmul.f32 1.0, %v603
        %v605 = vrcp.pop %v564
        %v606 = vmul.f32 1.0, %v605
        %v607 = vrcp.pop %v565
        %v608 = vmul.f32 1.0, %v607
        %v609 = vrcp.pop %v566
        %v610 = vmul.f32 1.0, %v609
        %v611 = vrcp.pop %v567
        %v612 = vmul.f32 1.0, %v611
        %v613 = vrcp.pop %v568
        %v614 = vmul.f32 1.0, %v613
        %v615 = vrcp.pop %v569
        %v616 = vmul.f32 1.0, %v615
        %v617 = vrcp.pop %v570
        %v618 = vmul.f32 1.0, %v617
        %v619 = vrcp.pop %v571
        %v620 = vmul.f32 1.0, %v619
        %v621 = vrcp.pop %v572
        %v622 = vmul.f32 1.0, %v621
        %v623 = vrcp.pop %v573
        %v624 = vmul.f32 1.0, %v623
        %v625 = vrcp.pop %v574
        %v626 = vmul.f32 1.0, %v625
        %v627 = vrcp.pop %v575
        %v628 = vmul.f32 1.0, %v627
        %v629 = vrcp.pop %v576
        %v630 = vmul.f32 1.0, %v629
        %v631 = vrcp.pop %v577
        %v632 = vmul.f32 1.0, %v631
        %v633 = vrcp.pop %v578
        %v634 = vmul.f32 1.0, %v633
        %v635 = vrcp.pop %v579
        %v636 = vmul.f32 1.0, %v635
        %v637 = vrcp.pop %v580
        %v638 = vmul.f32 1.0, %v637
        %v639 = vrcp.pop %v581
        %v640 = vmul.f32 1.0, %v639
        %v641 = vrcp.pop %v582
        %v642 = vmul.f32 1.0, %v641
        %v643 = vrcp.pop %v583
        %v644 = vmul.f32 1.0, %v643
        %v645 = vrcp.pop %v584
        %v646 = vmul.f32 1.0, %v645
        %v647 = vrcp.pop %v585
        %v648 = vmul.f32 1.0, %v647
        %v649 = vrcp.pop %v586
        %v650 = vmul.f32 1.0, %v649
        %v651 = vmul.f32 %v588, %v590
        %v652 = vmul.f32 %v592, %v594
        %v653 = vmul.f32 %v596, %v598
        %v654 = vmul.f32 %v600, %v602
        %v655 = vmul.f32 %v604, %v606
        %v656 = vmul.f32 %v608, %v610
        %v657 = vmul.f32 %v612, %v614
        %v658 = vmul.f32 %v616, %v618
        %v659 = vmul.f32 %v620, %v622
        %v660 = vmul.f32 %v624, %v626
        %v661 = vmul.f32 %v628, %v630
        %v662 = vmul.f32 %v632, %v634
        %v663 = vmul.f32 %v636, %v638
        %v664 = vmul.f32 %v640, %v642
        %v665 = vmul.f32 %v644, %v646
        %v666 = vmul.f32 %v648, %v650
        %v667 = vpack.c.bf16 %v652, %v651
        %v668 = vpack.c.bf16 %v654, %v653
        %v669 = vpack.c.bf16 %v656, %v655
        %v670 = vpack.c.bf16 %v658, %v657
        %v671 = vpack.c.bf16 %v660, %v659
        %v672 = vpack.c.bf16 %v662, %v661
        %v673 = vpack.c.bf16 %v664, %v663
        %v674 = vpack.c.bf16 %v666, %v665
        %v675 = vld [vmem:[#allocation2] sm:$0xf]
        %v676 = vld [vmem:[#allocation2 + $0x4] sm:$0xf]
        %v677 = vld [vmem:[#allocation2 + $0x8] sm:$0xf]
        %v678 = vld [vmem:[#allocation2 + $0xc] sm:$0xf]
        %v679 = vld [vmem:[#allocation2 + $0x10] sm:$0xf]
        %v680 = vld [vmem:[#allocation2 + $0x14] sm:$0xf]
        %v681 = vld [vmem:[#allocation2 + $0x18] sm:$0xf]
        %v682 = vld [vmem:[#allocation2 + $0x1c] sm:$0xf]
        %v683 = vld [vmem:[#allocation2 + $0x20] sm:$0xf]
        %v684 = vld [vmem:[#allocation2 + $0x24] sm:$0xf]
        %v685 = vld [vmem:[#allocation2 + $0x28] sm:$0xf]
        %v686 = vld [vmem:[#allocation2 + $0x2c] sm:$0xf]
        %v687 = vld [vmem:[#allocation2 + $0x30] sm:$0xf]
        %v688 = vld [vmem:[#allocation2 + $0x34] sm:$0xf]
        %v689 = vld [vmem:[#allocation2 + $0x38] sm:$0xf]
        %v690 = vld [vmem:[#allocation2 + $0x3c] sm:$0xf]
        %v691 = vlaneseq
        %v692 = vshrl.u32 %v691, 7
        %v693 = vsub.s32 1, %v692
        %v694 = vrot.slane %v242, %v693
        %v711 = vunpack.c.l.b16 %v675
        %v712 = vunpack.c.l.b16 %v676
        %v713 = vunpack.c.l.b16 %v677
        %v714 = vunpack.c.l.b16 %v678
        %v715 = vunpack.c.l.b16 %v679
        %v716 = vunpack.c.l.b16 %v680
        %v717 = vunpack.c.l.b16 %v681
        %v718 = vunpack.c.l.b16 %v682
        %v719 = vunpack.c.l.b16 %v683
        %v720 = vunpack.c.l.b16 %v684
        %v721 = vunpack.c.l.b16 %v685
        %v722 = vunpack.c.l.b16 %v686
        %v723 = vunpack.c.l.b16 %v687
        %v724 = vunpack.c.l.b16 %v688
        %v725 = vunpack.c.l.b16 %v689
        %v726 = vunpack.c.l.b16 %v690
        %v727 = vpack.c.b16 %v712, %v711
        %v728 = vpack.c.b16 %v714, %v713
        %v729 = vpack.c.b16 %v716, %v715
        %v730 = vpack.c.b16 %v718, %v717
        %v731 = vpack.c.b16 %v720, %v719
        %v732 = vpack.c.b16 %v722, %v721
        %v733 = vpack.c.b16 %v724, %v723
        %v734 = vpack.c.b16 %v726, %v725
        %743 = vmatprep.subr.bf16.mxu0 0
        %744 = vmatpush1.bf16.msra.mxu0 %v727
        %745 = vmatprep.subr.bf16.mxu0 0
        %746 = vmatpush1.bf16.msra.mxu0 %v728
        %747 = vmatprep.subr.bf16.mxu0 0
        %748 = vmatpush1.bf16.msra.mxu0 %v729
        %749 = vmatprep.subr.bf16.mxu0 0
        %750 = vmatpush1.bf16.msra.mxu0 %v730
        %751 = vmatprep.subr.bf16.mxu0 0
        %752 = vmatpush1.bf16.msra.mxu0 %v731
        %753 = vmatprep.subr.bf16.mxu0 0
        %754 = vmatpush1.bf16.msra.mxu0 %v732
        %755 = vmatprep.subr.bf16.mxu0 0
        %756 = vmatpush1.bf16.msra.mxu0 %v733
        %757 = vmatprep.subr.bf16.mxu0 0
        %758 = vmatpush1.bf16.msra.mxu0 %v734
        %759 = vmatprep.subr.bf16.mxu0 0
        %760 = vmatpush1.bf16.msra.mxu0 0
        %761 = vmatprep.subr.bf16.mxu0 0
        %762 = vmatpush1.bf16.msra.mxu0 0
        %763 = vmatprep.subr.bf16.mxu0 0
        %764 = vmatpush1.bf16.msra.mxu0 0
        %765 = vmatprep.subr.bf16.mxu0 0
        %766 = vmatpush1.bf16.msra.mxu0 0
        %767 = vmatprep.subr.bf16.mxu0 0
        %768 = vmatpush1.bf16.msra.mxu0 0
        %769 = vmatprep.subr.bf16.mxu0 0
        %770 = vmatpush1.bf16.msra.mxu0 0
        %771 = vmatprep.subr.bf16.mxu0 0
        %772 = vmatpush1.bf16.msra.mxu0 0
        %773 = vmatprep.subr.bf16.mxu0 0
        %774 = vmatpush1.bf16.msra.mxu0 0
        %775 = vmatprep.mubr.bf16.mxu0 0
        %776 = vmatmul.mubr.bf16.gmra.mrb[0].mxu0 %v667
        %v777 = vpop.f32.mrb[0].mxu0
        %v778 = vadd.f32 %v694, %v777
        %v779 = vpop.f32.mrb[0].mxu0
        %v780 = vpop.f32.mrb[0].mxu0
        %v781 = vadd.f32 %v694, %v780
        %v782 = vpop.f32.mrb[0].mxu0
        %783 = vmatprep.mubr.bf16.mxu0 0
        %784 = vmatmul.mubr.bf16.gmra.mrb[0].mxu0 %v668
        %v785 = vpop.f32.mrb[0].mxu0
        %v786 = vadd.f32 %v694, %v785
        %v787 = vpop.f32.mrb[0].mxu0
        %v788 = vpop.f32.mrb[0].mxu0
        %v789 = vadd.f32 %v694, %v788
        %v790 = vpop.f32.mrb[0].mxu0
        %791 = vmatprep.mubr.bf16.mxu0 0
        %792 = vmatmul.mubr.bf16.gmra.mrb[0].mxu0 %v669
        %v793 = vpop.f32.mrb[0].mxu0
        %v794 = vadd.f32 %v694, %v793
        %v795 = vpop.f32.mrb[0].mxu0
        %v796 = vpop.f32.mrb[0].mxu0
        %v797 = vadd.f32 %v694, %v796
        %v798 = vpop.f32.mrb[0].mxu0
        %799 = vmatprep.mubr.bf16.mxu0 0
        %800 = vmatmul.mubr.bf16.gmra.mrb[0].mxu0 %v670
        %v801 = vpop.f32.mrb[0].mxu0
        %v802 = vadd.f32 %v694, %v801
        %v803 = vpop.f32.mrb[0].mxu0
        %v804 = vpop.f32.mrb[0].mxu0
        %v805 = vadd.f32 %v694, %v804
        %v806 = vpop.f32.mrb[0].mxu0
        %807 = vmatprep.mubr.bf16.mxu0 0
        %808 = vmatmul.mubr.bf16.gmra.mrb[0].mxu0 %v671
        %v809 = vpop.f32.mrb[0].mxu0
        %v810 = vadd.f32 %v694, %v809
        %v811 = vpop.f32.mrb[0].mxu0
        %v812 = vpop.f32.mrb[0].mxu0
        %v813 = vadd.f32 %v694, %v812
        %v814 = vpop.f32.mrb[0].mxu0
        %815 = vmatprep.mubr.bf16.mxu0 0
        %816 = vmatmul.mubr.bf16.gmra.mrb[0].mxu0 %v672
        %v817 = vpop.f32.mrb[0].mxu0
        %v818 = vadd.f32 %v694, %v817
        %v819 = vpop.f32.mrb[0].mxu0
        %v820 = vpop.f32.mrb[0].mxu0
        %v821 = vadd.f32 %v694, %v820
        %v822 = vpop.f32.mrb[0].mxu0
        %823 = vmatprep.mubr.bf16.mxu0 0
        %824 = vmatmul.mubr.bf16.gmra.mrb[0].mxu0 %v673
        %v825 = vpop.f32.mrb[0].mxu0
        %v826 = vadd.f32 %v694, %v825
        %v827 = vpop.f32.mrb[0].mxu0
        %v828 = vpop.f32.mrb[0].mxu0
        %v829 = vadd.f32 %v694, %v828
        %v830 = vpop.f32.mrb[0].mxu0
        %831 = vmatprep.mubr.bf16.mxu0 0
        %832 = vmatmul.mubr.bf16.gmra.mrb[0].mxu0 %v674
        %v833 = vpop.f32.mrb[0].mxu0
        %v834 = vadd.f32 %v694, %v833
        %v835 = vpop.f32.mrb[0].mxu0
        %v836 = vpop.f32.mrb[0].mxu0
        %v837 = vadd.f32 %v694, %v836
        %v838 = vpop.f32.mrb[0].mxu0
        %839 = vdwg.mxu0
        %v840 = vmax.f32 %v778, 0.0
        %v841 = vmax.f32 %v781, 0.0
        %v842 = vmax.f32 %v786, 0.0
        %v843 = vmax.f32 %v789, 0.0
        %v844 = vmax.f32 %v794, 0.0
        %v845 = vmax.f32 %v797, 0.0
        %v846 = vmax.f32 %v802, 0.0
        %v847 = vmax.f32 %v805, 0.0
        %v848 = vmax.f32 %v810, 0.0
        %v849 = vmax.f32 %v813, 0.0
        %v850 = vmax.f32 %v818, 0.0
        %v851 = vmax.f32 %v821, 0.0
        %v852 = vmax.f32 %v826, 0.0
        %v853 = vmax.f32 %v829, 0.0
        %v854 = vmax.f32 %v834, 0.0
        %v855 = vmax.f32 %v837, 0.0
        %v856 = vpack.c.bf16 %v841, %v840
        %v857 = vpack.c.bf16 %v843, %v842
        %v858 = vpack.c.bf16 %v845, %v844
        %v859 = vpack.c.bf16 %v847, %v846
        %v860 = vpack.c.bf16 %v849, %v848
        %v861 = vpack.c.bf16 %v851, %v850
        %v862 = vpack.c.bf16 %v853, %v852
        %v863 = vpack.c.bf16 %v855, %v854
        %s864 = scalar_lea.vmem [#allocation2], 64
        %v865 = vld [vmem:[%s864] sm:$0xf]
        %v866 = vld [vmem:[%s864 + $0x4] sm:$0xf]
        %v867 = vld [vmem:[%s864 + $0x8] sm:$0xf]
        %v868 = vld [vmem:[%s864 + $0xc] sm:$0xf]
        %v869 = vld [vmem:[%s864 + $0x10] sm:$0xf]
        %v870 = vld [vmem:[%s864 + $0x14] sm:$0xf]
        %v871 = vld [vmem:[%s864 + $0x18] sm:$0xf]
        %v872 = vld [vmem:[%s864 + $0x1c] sm:$0xf]
        %v873 = vld [vmem:[%s864 + $0x20] sm:$0xf]
        %v874 = vld [vmem:[%s864 + $0x24] sm:$0xf]
        %v875 = vld [vmem:[%s864 + $0x28] sm:$0xf]
        %v876 = vld [vmem:[%s864 + $0x2c] sm:$0xf]
        %v877 = vld [vmem:[%s864 + $0x30] sm:$0xf]
        %v878 = vld [vmem:[%s864 + $0x34] sm:$0xf]
        %v879 = vld [vmem:[%s864 + $0x38] sm:$0xf]
        %v880 = vld [vmem:[%s864 + $0x3c] sm:$0xf]
        %v881 = vlaneseq
        %v882 = vshrl.u32 %v881, 7
        %v883 = vsub.s32 2, %v882
        %v884 = vrot.slane %v242, %v883
        %v901 = vunpack.c.l.b16 %v865
        %v902 = vunpack.c.l.b16 %v866
        %v903 = vunpack.c.l.b16 %v867
        %v904 = vunpack.c.l.b16 %v868
        %v905 = vunpack.c.l.b16 %v869
        %v906 = vunpack.c.l.b16 %v870
        %v907 = vunpack.c.l.b16 %v871
        %v908 = vunpack.c.l.b16 %v872
        %v909 = vunpack.c.l.b16 %v873
        %v910 = vunpack.c.l.b16 %v874
        %v911 = vunpack.c.l.b16 %v875
        %v912 = vunpack.c.l.b16 %v876
        %v913 = vunpack.c.l.b16 %v877
        %v914 = vunpack.c.l.b16 %v878
        %v915 = vunpack.c.l.b16 %v879
        %v916 = vunpack.c.l.b16 %v880
        %v917 = vpack.c.b16 %v902, %v901
        %v918 = vpack.c.b16 %v904, %v903
        %v919 = vpack.c.b16 %v906, %v905
        %v920 = vpack.c.b16 %v908, %v907
        %v921 = vpack.c.b16 %v910, %v909
        %v922 = vpack.c.b16 %v912, %v911
        %v923 = vpack.c.b16 %v914, %v913
        %v924 = vpack.c.b16 %v916, %v915
        %933 = vmatprep.subr.bf16.mxu0 0
        %934 = vmatpush1.bf16.msra.mxu0 %v917
        %935 = vmatprep.subr.bf16.mxu0 0
        %936 = vmatpush1.bf16.msra.mxu0 %v918
        %937 = vmatprep.subr.bf16.mxu0 0
        %938 = vmatpush1.bf16.msra.mxu0 %v919
        %939 = vmatprep.subr.bf16.mxu0 0
        %940 = vmatpush1.bf16.msra.mxu0 %v920
        %941 = vmatprep.subr.bf16.mxu0 0
        %942 = vmatpush1.bf16.msra.mxu0 %v921
        %943 = vmatprep.subr.bf16.mxu0 0
        %944 = vmatpush1.bf16.msra.mxu0 %v922
        %945 = vmatprep.subr.bf16.mxu0 0
        %946 = vmatpush1.bf16.msra.mxu0 %v923
        %947 = vmatprep.subr.bf16.mxu0 0
        %948 = vmatpush1.bf16.msra.mxu0 %v924
        %949 = vmatprep.subr.bf16.mxu0 0
        %950 = vmatpush1.bf16.msra.mxu0 0
        %951 = vmatprep.subr.bf16.mxu0 0
        %952 = vmatpush1.bf16.msra.mxu0 0
        %953 = vmatprep.subr.bf16.mxu0 0
        %954 = vmatpush1.bf16.msra.mxu0 0
        %955 = vmatprep.subr.bf16.mxu0 0
        %956 = vmatpush1.bf16.msra.mxu0 0
        %957 = vmatprep.subr.bf16.mxu0 0
        %958 = vmatpush1.bf16.msra.mxu0 0
        %959 = vmatprep.subr.bf16.mxu0 0
        %960 = vmatpush1.bf16.msra.mxu0 0
        %961 = vmatprep.subr.bf16.mxu0 0
        %962 = vmatpush1.bf16.msra.mxu0 0
        %963 = vmatprep.subr.bf16.mxu0 0
        %964 = vmatpush1.bf16.msra.mxu0 0
        %965 = vmatprep.mubr.bf16.mxu0 0
        %966 = vmatmul.mubr.bf16.gmra.mrb[0].mxu0 %v856
        %v967 = vpop.f32.mrb[0].mxu0
        %v968 = vadd.f32 %v884, %v967
        %v969 = vpop.f32.mrb[0].mxu0
        %v970 = vpop.f32.mrb[0].mxu0
        %v971 = vadd.f32 %v884, %v970
        %v972 = vpop.f32.mrb[0].mxu0
        %973 = vmatprep.mubr.bf16.mxu0 0
        %974 = vmatmul.mubr.bf16.gmra.mrb[0].mxu0 %v857
        %v975 = vpop.f32.mrb[0].mxu0
        %v976 = vadd.f32 %v884, %v975
        %v977 = vpop.f32.mrb[0].mxu0
        %v978 = vpop.f32.mrb[0].mxu0
        %v979 = vadd.f32 %v884, %v978
        %v980 = vpop.f32.mrb[0].mxu0
        %981 = vmatprep.mubr.bf16.mxu0 0
        %982 = vmatmul.mubr.bf16.gmra.mrb[0].mxu0 %v858
        %v983 = vpop.f32.mrb[0].mxu0
        %v984 = vadd.f32 %v884, %v983
        %v985 = vpop.f32.mrb[0].mxu0
        %v986 = vpop.f32.mrb[0].mxu0
        %v987 = vadd.f32 %v884, %v986
        %v988 = vpop.f32.mrb[0].mxu0
        %989 = vmatprep.mubr.bf16.mxu0 0
        %990 = vmatmul.mubr.bf16.gmra.mrb[0].mxu0 %v859
        %v991 = vpop.f32.mrb[0].mxu0
        %v992 = vadd.f32 %v884, %v991
        %v993 = vpop.f32.mrb[0].mxu0
        %v994 = vpop.f32.mrb[0].mxu0
        %v995 = vadd.f32 %v884, %v994
        %v996 = vpop.f32.mrb[0].mxu0
        %997 = vmatprep.mubr.bf16.mxu0 0
        %998 = vmatmul.mubr.bf16.gmra.mrb[0].mxu0 %v860
        %v999 = vpop.f32.mrb[0].mxu0
        %v1000 = vadd.f32 %v884, %v999
        %v1001 = vpop.f32.mrb[0].mxu0
        %v1002 = vpop.f32.mrb[0].mxu0
        %v1003 = vadd.f32 %v884, %v1002
        %v1004 = vpop.f32.mrb[0].mxu0
        %1005 = vmatprep.mubr.bf16.mxu0 0
        %1006 = vmatmul.mubr.bf16.gmra.mrb[0].mxu0 %v861
        %v1007 = vpop.f32.mrb[0].mxu0
        %v1008 = vadd.f32 %v884, %v1007
        %v1009 = vpop.f32.mrb[0].mxu0
        %v1010 = vpop.f32.mrb[0].mxu0
        %v1011 = vadd.f32 %v884, %v1010
        %v1012 = vpop.f32.mrb[0].mxu0
        %1013 = vmatprep.mubr.bf16.mxu0 0
        %1014 = vmatmul.mubr.bf16.gmra.mrb[0].mxu0 %v862
        %v1015 = vpop.f32.mrb[0].mxu0
        %v1016 = vadd.f32 %v884, %v1015
        %v1017 = vpop.f32.mrb[0].mxu0
        %v1018 = vpop.f32.mrb[0].mxu0
        %v1019 = vadd.f32 %v884, %v1018
        %v1020 = vpop.f32.mrb[0].mxu0
        %1021 = vmatprep.mubr.bf16.mxu0 0
        %1022 = vmatmul.mubr.bf16.gmra.mrb[0].mxu0 %v863
        %v1023 = vpop.f32.mrb[0].mxu0
        %v1024 = vadd.f32 %v884, %v1023
        %v1025 = vpop.f32.mrb[0].mxu0
        %v1026 = vpop.f32.mrb[0].mxu0
        %v1027 = vadd.f32 %v884, %v1026
        %v1028 = vpop.f32.mrb[0].mxu0
        %1029 = vdwg.mxu0
        %v1030 = vmax.f32 %v968, 0.0
        %v1031 = vmax.f32 %v971, 0.0
        %v1032 = vmax.f32 %v976, 0.0
        %v1033 = vmax.f32 %v979, 0.0
        %v1034 = vmax.f32 %v984, 0.0
        %v1035 = vmax.f32 %v987, 0.0
        %v1036 = vmax.f32 %v992, 0.0
        %v1037 = vmax.f32 %v995, 0.0
        %v1038 = vmax.f32 %v1000, 0.0
        %v1039 = vmax.f32 %v1003, 0.0
        %v1040 = vmax.f32 %v1008, 0.0
        %v1041 = vmax.f32 %v1011, 0.0
        %v1042 = vmax.f32 %v1016, 0.0
        %v1043 = vmax.f32 %v1019, 0.0
        %v1044 = vmax.f32 %v1024, 0.0
        %v1045 = vmax.f32 %v1027, 0.0
        %v1046 = vpack.c.bf16 %v1031, %v1030
        %v1047 = vpack.c.bf16 %v1033, %v1032
        %v1048 = vpack.c.bf16 %v1035, %v1034
        %v1049 = vpack.c.bf16 %v1037, %v1036
        %v1050 = vpack.c.bf16 %v1039, %v1038
        %v1051 = vpack.c.bf16 %v1041, %v1040
        %v1052 = vpack.c.bf16 %v1043, %v1042
        %v1053 = vpack.c.bf16 %v1045, %v1044
        %s1054 = scalar_lea.vmem [#allocation2], 128
        %v1055 = vld [vmem:[%s1054] sm:$0xf]
        %v1056 = vld [vmem:[%s1054 + $0x4] sm:$0xf]
        %v1057 = vld [vmem:[%s1054 + $0x8] sm:$0xf]
        %v1058 = vld [vmem:[%s1054 + $0xc] sm:$0xf]
        %v1059 = vld [vmem:[%s1054 + $0x10] sm:$0xf]
        %v1060 = vld [vmem:[%s1054 + $0x14] sm:$0xf]
        %v1061 = vld [vmem:[%s1054 + $0x18] sm:$0xf]
        %v1062 = vld [vmem:[%s1054 + $0x1c] sm:$0xf]
        %v1063 = vld [vmem:[%s1054 + $0x20] sm:$0xf]
        %v1064 = vld [vmem:[%s1054 + $0x24] sm:$0xf]
        %v1065 = vld [vmem:[%s1054 + $0x28] sm:$0xf]
        %v1066 = vld [vmem:[%s1054 + $0x2c] sm:$0xf]
        %v1067 = vld [vmem:[%s1054 + $0x30] sm:$0xf]
        %v1068 = vld [vmem:[%s1054 + $0x34] sm:$0xf]
        %v1069 = vld [vmem:[%s1054 + $0x38] sm:$0xf]
        %v1070 = vld [vmem:[%s1054 + $0x3c] sm:$0xf]
        %v1071 = vlaneseq
        %v1072 = vshrl.u32 %v1071, 7
        %v1073 = vsub.s32 3, %v1072
        %v1074 = vrot.slane %v242, %v1073
        %v1091 = vunpack.c.l.b16 %v1055
        %v1092 = vunpack.c.l.b16 %v1056
        %v1093 = vunpack.c.l.b16 %v1057
        %v1094 = vunpack.c.l.b16 %v1058
        %v1095 = vunpack.c.l.b16 %v1059
        %v1096 = vunpack.c.l.b16 %v1060
        %v1097 = vunpack.c.l.b16 %v1061
        %v1098 = vunpack.c.l.b16 %v1062
        %v1099 = vunpack.c.l.b16 %v1063
        %v1100 = vunpack.c.l.b16 %v1064
        %v1101 = vunpack.c.l.b16 %v1065
        %v1102 = vunpack.c.l.b16 %v1066
        %v1103 = vunpack.c.l.b16 %v1067
        %v1104 = vunpack.c.l.b16 %v1068
        %v1105 = vunpack.c.l.b16 %v1069
        %v1106 = vunpack.c.l.b16 %v1070
        %v1107 = vpack.c.b16 %v1092, %v1091
        %v1108 = vpack.c.b16 %v1094, %v1093
        %v1109 = vpack.c.b16 %v1096, %v1095
        %v1110 = vpack.c.b16 %v1098, %v1097
        %v1111 = vpack.c.b16 %v1100, %v1099
        %v1112 = vpack.c.b16 %v1102, %v1101
        %v1113 = vpack.c.b16 %v1104, %v1103
        %v1114 = vpack.c.b16 %v1106, %v1105
        %1123 = vmatprep.subr.bf16.mxu0 0
        %1124 = vmatpush1.bf16.msra.mxu0 %v1107
        %1125 = vmatprep.subr.bf16.mxu0 0
        %1126 = vmatpush1.bf16.msra.mxu0 %v1108
        %1127 = vmatprep.subr.bf16.mxu0 0
        %1128 = vmatpush1.bf16.msra.mxu0 %v1109
        %1129 = vmatprep.subr.bf16.mxu0 0
        %1130 = vmatpush1.bf16.msra.mxu0 %v1110
        %1131 = vmatprep.subr.bf16.mxu0 0
        %1132 = vmatpush1.bf16.msra.mxu0 %v1111
        %1133 = vmatprep.subr.bf16.mxu0 0
        %1134 = vmatpush1.bf16.msra.mxu0 %v1112
        %1135 = vmatprep.subr.bf16.mxu0 0
        %1136 = vmatpush1.bf16.msra.mxu0 %v1113
        %1137 = vmatprep.subr.bf16.mxu0 0
        %1138 = vmatpush1.bf16.msra.mxu0 %v1114
        %1139 = vmatprep.subr.bf16.mxu0 0
        %1140 = vmatpush1.bf16.msra.mxu0 0
        %1141 = vmatprep.subr.bf16.mxu0 0
        %1142 = vmatpush1.bf16.msra.mxu0 0
        %1143 = vmatprep.subr.bf16.mxu0 0
        %1144 = vmatpush1.bf16.msra.mxu0 0
        %1145 = vmatprep.subr.bf16.mxu0 0
        %1146 = vmatpush1.bf16.msra.mxu0 0
        %1147 = vmatprep.subr.bf16.mxu0 0
        %1148 = vmatpush1.bf16.msra.mxu0 0
        %1149 = vmatprep.subr.bf16.mxu0 0
        %1150 = vmatpush1.bf16.msra.mxu0 0
        %1151 = vmatprep.subr.bf16.mxu0 0
        %1152 = vmatpush1.bf16.msra.mxu0 0
        %1153 = vmatprep.subr.bf16.mxu0 0
        %1154 = vmatpush1.bf16.msra.mxu0 0
        %1155 = vmatprep.mubr.bf16.mxu0 0
        %1156 = vmatmul.mubr.bf16.gmra.mrb[0].mxu0 %v1046
        %v1157 = vpop.f32.mrb[0].mxu0
        %v1158 = vadd.f32 %v1074, %v1157
        %v1159 = vpop.f32.mrb[0].mxu0
        %v1160 = vpop.f32.mrb[0].mxu0
        %v1161 = vadd.f32 %v1074, %v1160
        %v1162 = vpop.f32.mrb[0].mxu0
        %1163 = vmatprep.mubr.bf16.mxu0 0
        %1164 = vmatmul.mubr.bf16.gmra.mrb[0].mxu0 %v1047
        %v1165 = vpop.f32.mrb[0].mxu0
        %v1166 = vadd.f32 %v1074, %v1165
        %v1167 = vpop.f32.mrb[0].mxu0
        %v1168 = vpop.f32.mrb[0].mxu0
        %v1169 = vadd.f32 %v1074, %v1168
        %v1170 = vpop.f32.mrb[0].mxu0
        %1171 = vmatprep.mubr.bf16.mxu0 0
        %1172 = vmatmul.mubr.bf16.gmra.mrb[0].mxu0 %v1048
        %v1173 = vpop.f32.mrb[0].mxu0
        %v1174 = vadd.f32 %v1074, %v1173
        %v1175 = vpop.f32.mrb[0].mxu0
        %v1176 = vpop.f32.mrb[0].mxu0
        %v1177 = vadd.f32 %v1074, %v1176
        %v1178 = vpop.f32.mrb[0].mxu0
        %1179 = vmatprep.mubr.bf16.mxu0 0
        %1180 = vmatmul.mubr.bf16.gmra.mrb[0].mxu0 %v1049
        %v1181 = vpop.f32.mrb[0].mxu0
        %v1182 = vadd.f32 %v1074, %v1181
        %v1183 = vpop.f32.mrb[0].mxu0
        %v1184 = vpop.f32.mrb[0].mxu0
        %v1185 = vadd.f32 %v1074, %v1184
        %v1186 = vpop.f32.mrb[0].mxu0
        %1187 = vmatprep.mubr.bf16.mxu0 0
        %1188 = vmatmul.mubr.bf16.gmra.mrb[0].mxu0 %v1050
        %v1189 = vpop.f32.mrb[0].mxu0
        %v1190 = vadd.f32 %v1074, %v1189
        %v1191 = vpop.f32.mrb[0].mxu0
        %v1192 = vpop.f32.mrb[0].mxu0
        %v1193 = vadd.f32 %v1074, %v1192
        %v1194 = vpop.f32.mrb[0].mxu0
        %1195 = vmatprep.mubr.bf16.mxu0 0
        %1196 = vmatmul.mubr.bf16.gmra.mrb[0].mxu0 %v1051
        %v1197 = vpop.f32.mrb[0].mxu0
        %v1198 = vadd.f32 %v1074, %v1197
        %v1199 = vpop.f32.mrb[0].mxu0
        %v1200 = vpop.f32.mrb[0].mxu0
        %v1201 = vadd.f32 %v1074, %v1200
        %v1202 = vpop.f32.mrb[0].mxu0
        %1203 = vmatprep.mubr.bf16.mxu0 0
        %1204 = vmatmul.mubr.bf16.gmra.mrb[0].mxu0 %v1052
        %v1205 = vpop.f32.mrb[0].mxu0
        %v1206 = vadd.f32 %v1074, %v1205
        %v1207 = vpop.f32.mrb[0].mxu0
        %v1208 = vpop.f32.mrb[0].mxu0
        %v1209 = vadd.f32 %v1074, %v1208
        %v1210 = vpop.f32.mrb[0].mxu0
        %1211 = vmatprep.mubr.bf16.mxu0 0
        %1212 = vmatmul.mubr.bf16.gmra.mrb[0].mxu0 %v1053
        %v1213 = vpop.f32.mrb[0].mxu0
        %v1214 = vadd.f32 %v1074, %v1213
        %v1215 = vpop.f32.mrb[0].mxu0
        %v1216 = vpop.f32.mrb[0].mxu0
        %v1217 = vadd.f32 %v1074, %v1216
        %v1218 = vpop.f32.mrb[0].mxu0
        %1219 = vdwg.mxu0
        %v1220 = vmax.f32 %v1158, 0.0
        %v1221 = vmax.f32 %v1161, 0.0
        %v1222 = vmax.f32 %v1166, 0.0
        %v1223 = vmax.f32 %v1169, 0.0
        %v1224 = vmax.f32 %v1174, 0.0
        %v1225 = vmax.f32 %v1177, 0.0
        %v1226 = vmax.f32 %v1182, 0.0
        %v1227 = vmax.f32 %v1185, 0.0
        %v1228 = vmax.f32 %v1190, 0.0
        %v1229 = vmax.f32 %v1193, 0.0
        %v1230 = vmax.f32 %v1198, 0.0
        %v1231 = vmax.f32 %v1201, 0.0
        %v1232 = vmax.f32 %v1206, 0.0
        %v1233 = vmax.f32 %v1209, 0.0
        %v1234 = vmax.f32 %v1214, 0.0
        %v1235 = vmax.f32 %v1217, 0.0
        %v1236 = vpack.c.bf16 %v1221, %v1220
        %v1237 = vpack.c.bf16 %v1223, %v1222
        %v1238 = vpack.c.bf16 %v1225, %v1224
        %v1239 = vpack.c.bf16 %v1227, %v1226
        %v1240 = vpack.c.bf16 %v1229, %v1228
        %v1241 = vpack.c.bf16 %v1231, %v1230
        %v1242 = vpack.c.bf16 %v1233, %v1232
        %v1243 = vpack.c.bf16 %v1235, %v1234
        %v1244 = vld [vmem:[%s3] sm:$0xf]
        %v1245 = vld [vmem:[%s3 + $0x4] sm:$0xf]
        %v1246 = vld [vmem:[%s3 + $0x8] sm:$0xf]
        %v1247 = vld [vmem:[%s3 + $0xc] sm:$0xf]
        %v1248 = vld [vmem:[%s3 + $0x10] sm:$0xf]
        %v1249 = vld [vmem:[%s3 + $0x14] sm:$0xf]
        %v1250 = vld [vmem:[%s3 + $0x18] sm:$0xf]
        %v1251 = vld [vmem:[%s3 + $0x1c] sm:$0xf]
        %v1252 = vld [vmem:[%s3 + $0x20] sm:$0xf]
        %v1253 = vld [vmem:[%s3 + $0x24] sm:$0xf]
        %v1254 = vld [vmem:[%s3 + $0x28] sm:$0xf]
        %v1255 = vld [vmem:[%s3 + $0x2c] sm:$0xf]
        %v1256 = vld [vmem:[%s3 + $0x30] sm:$0xf]
        %v1257 = vld [vmem:[%s3 + $0x34] sm:$0xf]
        %v1258 = vld [vmem:[%s3 + $0x38] sm:$0xf]
        %v1259 = vld [vmem:[%s3 + $0x3c] sm:$0xf]
        %v1260 = vlaneseq
        %v1261 = vshrl.u32 %v1260, 7
        %v1262 = vsub.s32 4, %v1261
        %v1263 = vrot.slane %v242, %v1262
        %v1280 = vunpack.c.l.b16 %v1244
        %v1281 = vunpack.c.l.b16 %v1245
        %v1282 = vunpack.c.l.b16 %v1246
        %v1283 = vunpack.c.l.b16 %v1247
        %v1284 = vunpack.c.l.b16 %v1248
        %v1285 = vunpack.c.l.b16 %v1249
        %v1286 = vunpack.c.l.b16 %v1250
        %v1287 = vunpack.c.l.b16 %v1251
        %v1288 = vunpack.c.l.b16 %v1252
        %v1289 = vunpack.c.l.b16 %v1253
        %v1290 = vunpack.c.l.b16 %v1254
        %v1291 = vunpack.c.l.b16 %v1255
        %v1292 = vunpack.c.l.b16 %v1256
        %v1293 = vunpack.c.l.b16 %v1257
        %v1294 = vunpack.c.l.b16 %v1258
        %v1295 = vunpack.c.l.b16 %v1259
        %v1296 = vpack.c.b16 %v1281, %v1280
        %v1297 = vpack.c.b16 %v1283, %v1282
        %v1298 = vpack.c.b16 %v1285, %v1284
        %v1299 = vpack.c.b16 %v1287, %v1286
        %v1300 = vpack.c.b16 %v1289, %v1288
        %v1301 = vpack.c.b16 %v1291, %v1290
        %v1302 = vpack.c.b16 %v1293, %v1292
        %v1303 = vpack.c.b16 %v1295, %v1294
        %1312 = vmatprep.subr.bf16.mxu0 0
        %1313 = vmatpush1.bf16.msra.mxu0 %v1296
        %1314 = vmatprep.subr.bf16.mxu0 0
        %1315 = vmatpush1.bf16.msra.mxu0 %v1297
        %1316 = vmatprep.subr.bf16.mxu0 0
        %1317 = vmatpush1.bf16.msra.mxu0 %v1298
        %1318 = vmatprep.subr.bf16.mxu0 0
        %1319 = vmatpush1.bf16.msra.mxu0 %v1299
        %1320 = vmatprep.subr.bf16.mxu0 0
        %1321 = vmatpush1.bf16.msra.mxu0 %v1300
        %1322 = vmatprep.subr.bf16.mxu0 0
        %1323 = vmatpush1.bf16.msra.mxu0 %v1301
        %1324 = vmatprep.subr.bf16.mxu0 0
        %1325 = vmatpush1.bf16.msra.mxu0 %v1302
        %1326 = vmatprep.subr.bf16.mxu0 0
        %1327 = vmatpush1.bf16.msra.mxu0 %v1303
        %1328 = vmatprep.subr.bf16.mxu0 0
        %1329 = vmatpush1.bf16.msra.mxu0 0
        %1330 = vmatprep.subr.bf16.mxu0 0
        %1331 = vmatpush1.bf16.msra.mxu0 0
        %1332 = vmatprep.subr.bf16.mxu0 0
        %1333 = vmatpush1.bf16.msra.mxu0 0
        %1334 = vmatprep.subr.bf16.mxu0 0
        %1335 = vmatpush1.bf16.msra.mxu0 0
        %1336 = vmatprep.subr.bf16.mxu0 0
        %1337 = vmatpush1.bf16.msra.mxu0 0
        %1338 = vmatprep.subr.bf16.mxu0 0
        %1339 = vmatpush1.bf16.msra.mxu0 0
        %1340 = vmatprep.subr.bf16.mxu0 0
        %1341 = vmatpush1.bf16.msra.mxu0 0
        %1342 = vmatprep.subr.bf16.mxu0 0
        %1343 = vmatpush1.bf16.msra.mxu0 0
        %1344 = vmatprep.mubr.bf16.mxu0 0
        %1345 = vmatmul.mubr.bf16.gmra.mrb[0].mxu0 %v1236
        %v1346 = vpop.f32.mrb[0].mxu0
        %v1347 = vadd.f32 %v1263, %v1346
        %v1348 = vpop.f32.mrb[0].mxu0
        %v1349 = vpop.f32.mrb[0].mxu0
        %v1350 = vadd.f32 %v1263, %v1349
        %v1351 = vpop.f32.mrb[0].mxu0
        %1352 = vmatprep.mubr.bf16.mxu0 0
        %1353 = vmatmul.mubr.bf16.gmra.mrb[0].mxu0 %v1237
        %v1354 = vpop.f32.mrb[0].mxu0
        %v1355 = vadd.f32 %v1263, %v1354
        %v1356 = vpop.f32.mrb[0].mxu0
        %v1357 = vpop.f32.mrb[0].mxu0
        %v1358 = vadd.f32 %v1263, %v1357
        %v1359 = vpop.f32.mrb[0].mxu0
        %1360 = vmatprep.mubr.bf16.mxu0 0
        %1361 = vmatmul.mubr.bf16.gmra.mrb[0].mxu0 %v1238
        %v1362 = vpop.f32.mrb[0].mxu0
        %v1363 = vadd.f32 %v1263, %v1362
        %v1364 = vpop.f32.mrb[0].mxu0
        %v1365 = vpop.f32.mrb[0].mxu0
        %v1366 = vadd.f32 %v1263, %v1365
        %v1367 = vpop.f32.mrb[0].mxu0
        %1368 = vmatprep.mubr.bf16.mxu0 0
        %1369 = vmatmul.mubr.bf16.gmra.mrb[0].mxu0 %v1239
        %v1370 = vpop.f32.mrb[0].mxu0
        %v1371 = vadd.f32 %v1263, %v1370
        %v1372 = vpop.f32.mrb[0].mxu0
        %v1373 = vpop.f32.mrb[0].mxu0
        %v1374 = vadd.f32 %v1263, %v1373
        %v1375 = vpop.f32.mrb[0].mxu0
        %1376 = vmatprep.mubr.bf16.mxu0 0
        %1377 = vmatmul.mubr.bf16.gmra.mrb[0].mxu0 %v1240
        %v1378 = vpop.f32.mrb[0].mxu0
        %v1379 = vadd.f32 %v1263, %v1378
        %v1380 = vpop.f32.mrb[0].mxu0
        %v1381 = vpop.f32.mrb[0].mxu0
        %v1382 = vadd.f32 %v1263, %v1381
        %v1383 = vpop.f32.mrb[0].mxu0
        %1384 = vmatprep.mubr.bf16.mxu0 0
        %1385 = vmatmul.mubr.bf16.gmra.mrb[0].mxu0 %v1241
        %v1386 = vpop.f32.mrb[0].mxu0
        %v1387 = vadd.f32 %v1263, %v1386
        %v1388 = vpop.f32.mrb[0].mxu0
        %v1389 = vpop.f32.mrb[0].mxu0
        %v1390 = vadd.f32 %v1263, %v1389
        %v1391 = vpop.f32.mrb[0].mxu0
        %1392 = vmatprep.mubr.bf16.mxu0 0
        %1393 = vmatmul.mubr.bf16.gmra.mrb[0].mxu0 %v1242
        %v1394 = vpop.f32.mrb[0].mxu0
        %v1395 = vadd.f32 %v1263, %v1394
        %v1396 = vpop.f32.mrb[0].mxu0
        %v1397 = vpop.f32.mrb[0].mxu0
        %v1398 = vadd.f32 %v1263, %v1397
        %v1399 = vpop.f32.mrb[0].mxu0
        %1400 = vmatprep.mubr.bf16.mxu0 0
        %1401 = vmatmul.mubr.bf16.gmra.mrb[0].mxu0 %v1243
        %v1402 = vpop.f32.mrb[0].mxu0
        %v1403 = vadd.f32 %v1263, %v1402
        %v1404 = vpop.f32.mrb[0].mxu0
        %v1405 = vpop.f32.mrb[0].mxu0
        %v1406 = vadd.f32 %v1263, %v1405
        %v1407 = vpop.f32.mrb[0].mxu0
        %1408 = vdwg.mxu0
        %1409 = vmax.xlane.f32.xlu0 %v1347
        %v1410 = vpop.xlane.xlu0 %1409
        %1411 = vmax.xlane.f32.xlu0 %v1350
        %v1412 = vpop.xlane.xlu0 %1411
        %1413 = vmax.xlane.f32.xlu0 %v1355
        %v1414 = vpop.xlane.xlu0 %1413
        %1415 = vmax.xlane.f32.xlu0 %v1358
        %v1416 = vpop.xlane.xlu0 %1415
        %1417 = vmax.xlane.f32.xlu0 %v1363
        %v1418 = vpop.xlane.xlu0 %1417
        %1419 = vmax.xlane.f32.xlu0 %v1366
        %v1420 = vpop.xlane.xlu0 %1419
        %1421 = vmax.xlane.f32.xlu0 %v1371
        %v1422 = vpop.xlane.xlu0 %1421
        %1423 = vmax.xlane.f32.xlu0 %v1374
        %v1424 = vpop.xlane.xlu0 %1423
        %1425 = vmax.xlane.f32.xlu0 %v1379
        %v1426 = vpop.xlane.xlu0 %1425
        %1427 = vmax.xlane.f32.xlu0 %v1382
        %v1428 = vpop.xlane.xlu0 %1427
        %1429 = vmax.xlane.f32.xlu0 %v1387
        %v1430 = vpop.xlane.xlu0 %1429
        %1431 = vmax.xlane.f32.xlu0 %v1390
        %v1432 = vpop.xlane.xlu0 %1431
        %1433 = vmax.xlane.f32.xlu0 %v1395
        %v1434 = vpop.xlane.xlu0 %1433
        %1435 = vmax.xlane.f32.xlu0 %v1398
        %v1436 = vpop.xlane.xlu0 %1435
        %1437 = vmax.xlane.f32.xlu0 %v1403
        %v1438 = vpop.xlane.xlu0 %1437
        %1439 = vmax.xlane.f32.xlu0 %v1406
        %v1440 = vpop.xlane.xlu0 %1439
        %v1441 = vsub.f32 %v1347, %v1410
        %v1442 = vsub.f32 %v1350, %v1412
        %v1443 = vsub.f32 %v1355, %v1414
        %v1444 = vsub.f32 %v1358, %v1416
        %v1445 = vsub.f32 %v1363, %v1418
        %v1446 = vsub.f32 %v1366, %v1420
        %v1447 = vsub.f32 %v1371, %v1422
        %v1448 = vsub.f32 %v1374, %v1424
        %v1449 = vsub.f32 %v1379, %v1426
        %v1450 = vsub.f32 %v1382, %v1428
        %v1451 = vsub.f32 %v1387, %v1430
        %v1452 = vsub.f32 %v1390, %v1432
        %v1453 = vsub.f32 %v1395, %v1434
        %v1454 = vsub.f32 %v1398, %v1436
        %v1455 = vsub.f32 %v1403, %v1438
        %v1456 = vsub.f32 %v1406, %v1440
        %v1457 = vmul.f32 %v1441, 1.442695
        %v1458 = vpow.pop %v1457
        %v1459 = vmul.f32 %v1442, 1.442695
        %v1460 = vpow.pop %v1459
        %v1461 = vmul.f32 %v1443, 1.442695
        %v1462 = vpow.pop %v1461
        %v1463 = vmul.f32 %v1444, 1.442695
        %v1464 = vpow.pop %v1463
        %v1465 = vmul.f32 %v1445, 1.442695
        %v1466 = vpow.pop %v1465
        %v1467 = vmul.f32 %v1446, 1.442695
        %v1468 = vpow.pop %v1467
        %v1469 = vmul.f32 %v1447, 1.442695
        %v1470 = vpow.pop %v1469
        %v1471 = vmul.f32 %v1448, 1.442695
        %v1472 = vpow.pop %v1471
        %v1473 = vmul.f32 %v1449, 1.442695
        %v1474 = vpow.pop %v1473
        %v1475 = vmul.f32 %v1450, 1.442695
        %v1476 = vpow.pop %v1475
        %v1477 = vmul.f32 %v1451, 1.442695
        %v1478 = vpow.pop %v1477
        %v1479 = vmul.f32 %v1452, 1.442695
        %v1480 = vpow.pop %v1479
        %v1481 = vmul.f32 %v1453, 1.442695
        %v1482 = vpow.pop %v1481
        %v1483 = vmul.f32 %v1454, 1.442695
        %v1484 = vpow.pop %v1483
        %v1485 = vmul.f32 %v1455, 1.442695
        %v1486 = vpow.pop %v1485
        %v1487 = vmul.f32 %v1456, 1.442695
        %v1488 = vpow.pop %v1487
        %1489 = vadd.xlane.f32.xlu0 %v1458
        %v1490 = vpop.xlane.xlu0 %1489
        %1491 = vadd.xlane.f32.xlu0 %v1460
        %v1492 = vpop.xlane.xlu0 %1491
        %1493 = vadd.xlane.f32.xlu0 %v1462
        %v1494 = vpop.xlane.xlu0 %1493
        %1495 = vadd.xlane.f32.xlu0 %v1464
        %v1496 = vpop.xlane.xlu0 %1495
        %1497 = vadd.xlane.f32.xlu0 %v1466
        %v1498 = vpop.xlane.xlu0 %1497
        %1499 = vadd.xlane.f32.xlu0 %v1468
        %v1500 = vpop.xlane.xlu0 %1499
        %1501 = vadd.xlane.f32.xlu0 %v1470
        %v1502 = vpop.xlane.xlu0 %1501
        %1503 = vadd.xlane.f32.xlu0 %v1472
        %v1504 = vpop.xlane.xlu0 %1503
        %1505 = vadd.xlane.f32.xlu0 %v1474
        %v1506 = vpop.xlane.xlu0 %1505
        %1507 = vadd.xlane.f32.xlu0 %v1476
        %v1508 = vpop.xlane.xlu0 %1507
        %1509 = vadd.xlane.f32.xlu0 %v1478
        %v1510 = vpop.xlane.xlu0 %1509
        %1511 = vadd.xlane.f32.xlu0 %v1480
        %v1512 = vpop.xlane.xlu0 %1511
        %1513 = vadd.xlane.f32.xlu0 %v1482
        %v1514 = vpop.xlane.xlu0 %1513
        %1515 = vadd.xlane.f32.xlu0 %v1484
        %v1516 = vpop.xlane.xlu0 %1515
        %1517 = vadd.xlane.f32.xlu0 %v1486
        %v1518 = vpop.xlane.xlu0 %1517
        %1519 = vadd.xlane.f32.xlu0 %v1488
        %v1520 = vpop.xlane.xlu0 %1519
        %v1521 = vrcp.pop %v1490
        %v1522 = vrcp.pop %v1492
        %v1523 = vrcp.pop %v1494
        %v1524 = vrcp.pop %v1496
        %v1525 = vrcp.pop %v1498
        %v1526 = vrcp.pop %v1500
        %v1527 = vrcp.pop %v1502
        %v1528 = vrcp.pop %v1504
        %v1529 = vrcp.pop %v1506
        %v1530 = vrcp.pop %v1508
        %v1531 = vrcp.pop %v1510
        %v1532 = vrcp.pop %v1512
        %v1533 = vrcp.pop %v1514
        %v1534 = vrcp.pop %v1516
        %v1535 = vrcp.pop %v1518
        %v1536 = vrcp.pop %v1520
        %v1537 = vmul.f32 %v1490, %v1521
        %v1538 = vmul.f32 %v1492, %v1522
        %v1539 = vmul.f32 %v1494, %v1523
        %v1540 = vmul.f32 %v1496, %v1524
        %v1541 = vmul.f32 %v1498, %v1525
        %v1542 = vmul.f32 %v1500, %v1526
        %v1543 = vmul.f32 %v1502, %v1527
        %v1544 = vmul.f32 %v1504, %v1528
        %v1545 = vmul.f32 %v1506, %v1529
        %v1546 = vmul.f32 %v1508, %v1530
        %v1547 = vmul.f32 %v1510, %v1531
        %v1548 = vmul.f32 %v1512, %v1532
        %v1549 = vmul.f32 %v1514, %v1533
        %v1550 = vmul.f32 %v1516, %v1534
        %v1551 = vmul.f32 %v1518, %v1535
        %v1552 = vmul.f32 %v1520, %v1536
        %v1553 = vsub.f32 2.0, %v1537
        %v1554 = vsub.f32 2.0, %v1538
        %v1555 = vsub.f32 2.0, %v1539
        %v1556 = vsub.f32 2.0, %v1540
        %v1557 = vsub.f32 2.0, %v1541
        %v1558 = vsub.f32 2.0, %v1542
        %v1559 = vsub.f32 2.0, %v1543
        %v1560 = vsub.f32 2.0, %v1544
        %v1561 = vsub.f32 2.0, %v1545
        %v1562 = vsub.f32 2.0, %v1546
        %v1563 = vsub.f32 2.0, %v1547
        %v1564 = vsub.f32 2.0, %v1548
        %v1565 = vsub.f32 2.0, %v1549
        %v1566 = vsub.f32 2.0, %v1550
        %v1567 = vsub.f32 2.0, %v1551
        %v1568 = vsub.f32 2.0, %v1552
        %v1569 = vmul.f32 %v1521, %v1553
        %v1570 = vmul.f32 %v1522, %v1554
        %v1571 = vmul.f32 %v1523, %v1555
        %v1572 = vmul.f32 %v1524, %v1556
        %v1573 = vmul.f32 %v1525, %v1557
        %v1574 = vmul.f32 %v1526, %v1558
        %v1575 = vmul.f32 %v1527, %v1559
        %v1576 = vmul.f32 %v1528, %v1560
        %v1577 = vmul.f32 %v1529, %v1561
        %v1578 = vmul.f32 %v1530, %v1562
        %v1579 = vmul.f32 %v1531, %v1563
        %v1580 = vmul.f32 %v1532, %v1564
        %v1581 = vmul.f32 %v1533, %v1565
        %v1582 = vmul.f32 %v1534, %v1566
        %v1583 = vmul.f32 %v1535, %v1567
        %v1584 = vmul.f32 %v1536, %v1568
        %v1585 = vmul.f32 %v1458, %v1569
        %v1586 = vmul.f32 %v1460, %v1570
        %v1587 = vmul.f32 %v1462, %v1571
        %v1588 = vmul.f32 %v1464, %v1572
        %v1589 = vmul.f32 %v1466, %v1573
        %v1590 = vmul.f32 %v1468, %v1574
        %v1591 = vmul.f32 %v1470, %v1575
        %v1592 = vmul.f32 %v1472, %v1576
        %v1593 = vmul.f32 %v1474, %v1577
        %v1594 = vmul.f32 %v1476, %v1578
        %v1595 = vmul.f32 %v1478, %v1579
        %v1596 = vmul.f32 %v1480, %v1580
        %v1597 = vmul.f32 %v1482, %v1581
        %v1598 = vmul.f32 %v1484, %v1582
        %v1599 = vmul.f32 %v1486, %v1583
        %v1600 = vmul.f32 %v1488, %v1584
        %v1601 = vpack.c.bf16 %v1586, %v1585
        %v1602 = vpack.c.bf16 %v1588, %v1587
        %v1603 = vpack.c.bf16 %v1590, %v1589
        %v1604 = vpack.c.bf16 %v1592, %v1591
        %v1605 = vpack.c.bf16 %v1594, %v1593
        %v1606 = vpack.c.bf16 %v1596, %v1595
        %v1607 = vpack.c.bf16 %v1598, %v1597
        %v1608 = vpack.c.bf16 %v1600, %v1599
        %v1617 = vunpack.c.l.b16 %v1601
        %v1618 = vunpack.c.h.b16 %v1601
        %v1619 = vunpack.c.l.b16 %v1602
        %v1620 = vunpack.c.h.b16 %v1602
        %v1621 = vunpack.c.l.b16 %v1603
        %v1622 = vunpack.c.h.b16 %v1603
        %v1623 = vunpack.c.l.b16 %v1604
        %v1624 = vunpack.c.h.b16 %v1604
        %v1625 = vunpack.c.l.b16 %v1605
        %v1626 = vunpack.c.h.b16 %v1605
        %v1627 = vunpack.c.l.b16 %v1606
        %v1628 = vunpack.c.h.b16 %v1606
        %v1629 = vunpack.c.l.b16 %v1607
        %v1630 = vunpack.c.h.b16 %v1607
        %v1631 = vunpack.c.l.b16 %v1608
        %v1632 = vunpack.c.h.b16 %v1608
        %v1633 = vpack.c.b16 %v1617, %v1617
        %v1634 = vpack.c.b16 %v1618, %v1618
        %v1635 = vpack.c.b16 %v1619, %v1619
        %v1636 = vpack.c.b16 %v1620, %v1620
        %v1637 = vpack.c.b16 %v1621, %v1621
        %v1638 = vpack.c.b16 %v1622, %v1622
        %v1639 = vpack.c.b16 %v1623, %v1623
        %v1640 = vpack.c.b16 %v1624, %v1624
        %v1641 = vpack.c.b16 %v1625, %v1625
        %v1642 = vpack.c.b16 %v1626, %v1626
        %v1643 = vpack.c.b16 %v1627, %v1627
        %v1644 = vpack.c.b16 %v1628, %v1628
        %v1645 = vpack.c.b16 %v1629, %v1629
        %v1646 = vpack.c.b16 %v1630, %v1630
        %v1647 = vpack.c.b16 %v1631, %v1631
        %v1648 = vpack.c.b16 %v1632, %v1632
        %1665 = vst [vmem:[%s233] sm:$0xf] %v1633
        %1666 = vst [vmem:[%s233 + $0x4] sm:$0xf] %v1634
        %1667 = vst [vmem:[%s233 + $0x8] sm:$0xf] %v1635
        %1668 = vst [vmem:[%s233 + $0xc] sm:$0xf] %v1636
        %1669 = vst [vmem:[%s233 + $0x10] sm:$0xf] %v1637
        %1670 = vst [vmem:[%s233 + $0x14] sm:$0xf] %v1638
        %1671 = vst [vmem:[%s233 + $0x18] sm:$0xf] %v1639
        %1672 = vst [vmem:[%s233 + $0x1c] sm:$0xf] %v1640
        %1673 = vst [vmem:[%s233 + $0x20] sm:$0xf] %v1641
        %1674 = vst [vmem:[%s233 + $0x24] sm:$0xf] %v1642
        %1675 = vst [vmem:[%s233 + $0x28] sm:$0xf] %v1643
        %1676 = vst [vmem:[%s233 + $0x2c] sm:$0xf] %v1644
        %1677 = vst [vmem:[%s233 + $0x30] sm:$0xf] %v1645
        %1678 = vst [vmem:[%s233 + $0x34] sm:$0xf] %v1646
        %1679 = vst [vmem:[%s233 + $0x38] sm:$0xf] %v1647
        %1680 = vst [vmem:[%s233 + $0x3c] sm:$0xf] %v1648
        %s1681 = sand.u32 %s138, 1
        %s1682 = scalar_lea.sflag [#allocation4], %s1681
        %s1683 = sand.u32 %s138, 1
        %s1684 = smul.addr %s1683, 64
        %s1685 = scalar_lea.vmem [#allocation5], %s1684
        // Predicated region
        $region45: #{tpu_custom_call.1} parent=39 // pred_check
          %p1686 = pneg %p148
        $region46: #{tpu_custom_call.1} parent=39 // pred_check_branch
          %1688 = sbr.rel (%p1686) target = $region48
        $region47: #{tpu_custom_call.1} parent=39 // pred_region
          %s1689 = smul.u32 16, %s20
          %s1691 = ssub.s32 1024, 1024
          %1692 = vsyncadd %s1682, %s1691
          %s1693 = smul.addr %s1689, 64
          %s1694 = scalar_lea.hbm %s5, %s1693
          %s1695 = sshll.u32 %s1685, 4
          %s1696 = int_to_ptr.vmem [resolvable:$true] %s1695
          %1701 = dma.vmem_to_hbm [thread:$0]  %s1696, 1024, %s1694, %s1682, 64, 64, 4
        $region48: #{tpu_custom_call.1} parent=39 // pred_fallthru
          _
      $region40: #{tpu_custom_call.1} parent=5 // pred_fallthru
        _
      %p1702 = scmp.le.s32.totalorder 2, %s15
      // Predicated region
      $region49: #{tpu_custom_call.1} parent=5 // pred_check
        %p1703 = pneg %p1702
      $region50: #{tpu_custom_call.1} parent=5 // pred_check_branch
        %1705 = sbr.rel (%p1703) target = $region52
      $region51: #{tpu_custom_call.1} parent=5 // pred_region
        %s1706 = ssub.s32 %s15, 2
        // Predicated region
        $region53: #{tpu_custom_call.1} parent=51 // pred_check
          %p1707 = pneg %p154
        $region54: #{tpu_custom_call.1} parent=51 // pred_check_branch
          %1709 = sbr.rel (%p1707) target = $region56
        $region55: #{tpu_custom_call.1} parent=51 // pred_region
          %s1710 = sand.u32 %s139, 1
          %s1711 = scalar_lea.sflag [#allocation4], %s1710
          %s1712 = sand.u32 %s139, 1
          %s1713 = smul.addr %s1712, 64
          %s1714 = scalar_lea.vmem [#allocation5], %s1713
          %1715 = dma.done %s1711, 1024
        $region56: #{tpu_custom_call.1} parent=51 // pred_fallthru
          _
      $region52: #{tpu_custom_call.1} parent=5 // pred_fallthru
        _
    $region6: #{tpu_custom_call.1} parent=1 // loop_footer
      %s19 = sadd.s32 1, %s15
    $region7: #{tpu_custom_call.1} parent=1 // loop_footer_branch
      %14 = sbr.rel target = $region3
    $region8: #{tpu_custom_call.1} parent=1 // loop_exit
      _
    %1716 = vsyncpa [#allocation3], 1
    %s1717 = scalar_lea.sflag [#allocation3], 1
    %1718 = vsyncpa %s1717, 1
    %1719 = vsyncpa [#allocation4], 1
    %s1720 = scalar_lea.sflag [#allocation4], 1
    %1721 = vsyncpa %s1720, 1

</llo_original>
